<compile_context>
chip_gen: v5e
topology: v5e:2x2
jax: 0.10.0
libtpu: 0.0.40
codegen_flags: <defaults>
</compile_context>

<pallas_src>
import functools

import jax
import jax.numpy as jnp
from jax import lax
from jax.experimental import pallas as pl
from jax.experimental.pallas import tpu as pltpu

LEAKY_SLOPE = 0.2
BN_EPS = 1e-5
DROPOUT_RATE = 0.3  # ModelParams.DROPOUT_RATE -- identity in eval mode
# TODO(synk): training-mode Dropout and BatchNorm batch-statistics are not
# implemented (eval-mode semantics: dropout = identity, BN = running stats).


# ---------------------------------------------------------------------------
# Pallas kernel: fused (nearest-upsampled) 3x3 conv + bias + activation.
#   out(TCout, M) = act( sum_{ki,kj} W_kikj(TCout,Cin) @ x_shift(Cin,M) + b )
# with M = OH*OW in the lane dimension (unmasked stores, channel-major NCHW).
# ---------------------------------------------------------------------------
def _resize_conv_kernel(x_ref, w_ref, b_ref, mask_ref, o_ref, *, ow, m, final_block):
    # x_ref    : (1, Cin, Lg)    bf16  row-padded + flattened image, 1-elem guards
    # w_ref    : (9, TCout, Cin) bf16  BN-folded weights, tap-major (ki*3+kj)
    # b_ref    : (TCout, 1)      f32   BN-folded bias
    # mask_ref : (2, M)          f32   left/right column-validity masks
    # o_ref    : (1, TCout, M)   bf16
    def tap(ki, kj):
        start = ki * ow + kj                      # guard(+1) and col(-1) folded in
        xs = x_ref[0, :, start:start + m]         # (Cin, M) bf16, static lane slice
        return jnp.dot(w_ref[ki * 3 + kj], xs,
                       preferred_element_type=jnp.float32)   # (TCout, M) f32

    acc_l = tap(0, 0) + tap(1, 0) + tap(2, 0)     # taps reading column w-1
    acc_c = tap(0, 1) + tap(1, 1) + tap(2, 1)     # taps reading column w
    acc_r = tap(0, 2) + tap(1, 2) + tap(2, 2)     # taps reading column w+1

    z = acc_c + acc_l * mask_ref[0:1, :] + acc_r * mask_ref[1:2, :] + b_ref[...]
    if final_block:
        z = jnp.tanh(z)                           # EUP
    else:
        z = jnp.maximum(z, LEAKY_SLOPE * z)       # LeakyReLU (BN folded into W, b)
    o_ref[0] = z.astype(o_ref.dtype)


def _fused_resize_conv(x_flat, w9, bias2d, masks, *, oh, ow, final_block):
    """x_flat: (B, Cin, Lg) bf16 -> (B, Cout, OH*OW) bf16."""
    B, Cin, Lg = x_flat.shape
    Cout = w9.shape[1]
    M = oh * ow

    # v7x megacore: the batch axis already feeds both TensorCores when B >= 2;
    # when B == 1 split the output channels instead (kept (8,128)-tileable).
    nct = 2 if (B == 1 and Cout % 16 == 0) else 1
    tcout = Cout // nct

    kernel = functools.partial(_resize_conv_kernel, ow=ow, m=M,
                               final_block=final_block)
    return pl.pallas_call(
        kernel,
        out_shape=jax.ShapeDtypeStruct((B, Cout, M), jnp.bfloat16),
        grid_spec=pltpu.PrefetchScalarGridSpec(
            num_scalar_prefetch=0,
            grid=(B, nct),
            in_specs=[
                pl.BlockSpec((1, Cin, Lg), lambda b, c: (b, 0, 0)),
                pl.BlockSpec((9, tcout, Cin), lambda b, c: (0, c, 0)),
                pl.BlockSpec((tcout, 1), lambda b, c: (c, 0)),
                pl.BlockSpec((2, M), lambda b, c: (0, 0)),
            ],
            out_specs=pl.BlockSpec((1, tcout, M), lambda b, c: (b, c, 0)),
        ),
        compiler_params=pltpu.CompilerParams(
            dimension_semantics=("parallel", "parallel"),
            vmem_limit_bytes=32 << 20),
    )(x_flat, w9, bias2d, masks)


# ---------------------------------------------------------------------------
# Plain-JAX glue: nearest upsample (bf16), flatten/pad, parameter build (BN fold).
# ---------------------------------------------------------------------------
def upsample_nearest(x, scale):
    return jnp.repeat(jnp.repeat(x, scale, axis=2), scale, axis=3)


def resize_conv_block(x, params, *, scale_factor=2):
    """Forward pass of ResizeConvBlock on NCHW input. Returns bf16 NCHW."""
    B, Cin, H, W = x.shape
    OH, OW = H * scale_factor, W * scale_factor

    # bf16 BEFORE upsample: the only HBM intermediate is the bf16 upsampled image.
    xu = upsample_nearest(x.astype(jnp.bfloat16), scale_factor)      # (B,Cin,OH,OW)
    # Zero-pad conv rows (top/bottom), flatten spatial row-major, add 1-element
    # guards so every in-kernel tap is an in-bounds static lane slice.
    xp = jnp.pad(xu, ((0, 0), (0, 0), (1, 1), (0, 0)))
    x_flat = jnp.pad(xp.reshape(B, Cin, (OH + 2) * OW), ((0, 0), (0, 0), (1, 1)))
    # TODO(synk): for very large images, fuse the nearest upsample itself into the
    # kernel (row-band manual DMA with halo) instead of materializing xu.

    # Column-validity masks: taps reading column w-1 are invalid at w==0,
    # taps reading column w+1 are invalid at w==OW-1 (conv zero padding).
    col = jnp.arange(OH * OW, dtype=jnp.int32) % OW
    masks = jnp.stack([(col != 0).astype(jnp.float32),
                       (col != OW - 1).astype(jnp.float32)])          # (2, M)

    y = _fused_resize_conv(x_flat, params["w9"], params["b2d"], masks,
                           oh=OH, ow=OW, final_block=params["final_block"])
    Cout = params["w9"].shape[1]
    return y.reshape(B, Cout, OH, OW)                                 # channel-major


def make_resize_conv_params(key, in_channels, out_channels, final_block):
    kw, kb, km, kv, kg, kbe = jax.random.split(key, 6)
    w = jax.random.normal(kw, (out_channels, in_channels, 3, 3), jnp.float32)
    w = w / jnp.sqrt(9.0 * in_channels)
    b = 0.01 * jax.random.normal(kb, (out_channels,), jnp.float32)
    bn = None
    if not final_block:
        # deterministic non-trivial running stats / affine params (eval mode)
        mean = 0.1 * jax.random.normal(km, (out_channels,), jnp.float32)
        var = 0.5 + jax.random.uniform(kv, (out_channels,), jnp.float32)
        gamma = 1.0 + 0.1 * jax.random.normal(kg, (out_channels,), jnp.float32)
        beta = 0.1 * jax.random.normal(kbe, (out_channels,), jnp.float32)
        bn = (mean, var, gamma, beta)
        scale = gamma / jnp.sqrt(var + BN_EPS)            # exact eval-mode BN fold
        w_fold = w * scale[:, None, None, None]
        b_fold = (b - mean) * scale + beta
    else:
        w_fold, b_fold = w, b
    # tap-major weights: w9[ki*3+kj, o, c] = w_fold[o, c, ki, kj]
    w9 = jnp.transpose(w_fold, (2, 3, 0, 1)).reshape(9, out_channels, in_channels)
    return dict(
        w=w, b=b, bn=bn, final_block=final_block,
        w9=w9.astype(jnp.bfloat16),
        b2d=b_fold.reshape(out_channels, 1).astype(jnp.float32),
    )


# ---------------------------------------------------------------------------
# Pure-JAX reference (for numerical verification).
# ---------------------------------------------------------------------------
def resize_conv_block_reference(x, params, *, scale_factor=2):
    xu = upsample_nearest(x.astype(jnp.float32), scale_factor)
    y = lax.conv_general_dilated(
        xu, params["w"], window_strides=(1, 1), padding=((1, 1), (1, 1)),
        dimension_numbers=("NCHW", "OIHW", "NCHW"))
    y = y + params["b"][None, :, None, None]
    if not params["final_block"]:
        mean, var, gamma, beta = params["bn"]
        y = (y - mean[None, :, None, None]) * (
            gamma[None, :, None, None] / jnp.sqrt(var[None, :, None, None] + BN_EPS)
        ) + beta[None, :, None, None]
        y = jnp.where(y >= 0, y, LEAKY_SLOPE * y)
        # Dropout: identity in eval mode
    else:
        y = jnp.tanh(y)
    return y


if __name__ == "__main__":
    key = jax.random.PRNGKey(0)
    kp1, kp2, kx = jax.random.split(key, 3)

    B, Cin, H, W = 2, 4, 16, 16
    Cout = 8
    x = jax.random.normal(kx, (B, Cin, H, W), dtype=jnp.float32)

    # Regular block: Upsample -> Conv3x3 -> BN -> LeakyReLU -> Dropout(identity)
    params = make_resize_conv_params(kp1, Cin, Cout, final_block=False)
    y = jax.block_until_ready(resize_conv_block(x, params, scale_factor=2))
    assert y.shape == (B, Cout, 2 * H, 2 * W), y.shape
    y_ref = resize_conv_block_reference(x, params, scale_factor=2)
    err = float(jnp.max(jnp.abs(y.astype(jnp.float32) - y_ref)))
    assert err < 0.1, f"regular-block mismatch vs reference: {err}"
    assert bool(jnp.all(jnp.isfinite(y.astype(jnp.float32))))

    # Final block: Upsample -> Conv3x3 -> Tanh
    params_f = make_resize_conv_params(kp2, Cout, Cin, final_block=True)
    yf = jax.block_until_ready(resize_conv_block(y, params_f, scale_factor=2))
    assert yf.shape == (B, Cin, 4 * H, 4 * W), yf.shape
    yf_ref = resize_conv_block_reference(y, params_f, scale_factor=2)
    errf = float(jnp.max(jnp.abs(yf.astype(jnp.float32) - yf_ref)))
    assert errf < 0.1, f"final-block mismatch vs reference: {errf}"
    assert bool(jnp.all(jnp.isfinite(yf.astype(jnp.float32))))

    print("KERNEL_OK")
</pallas_src>

<mosaic_0001>
module attributes {stable_mosaic.version = 11 : i64} {
  func.func @_resize_conv_kernel(%arg0: i32, %arg1: i32, %arg2: memref<1x4x1090xbf16, #tpu.memory_space<vmem>>, %arg3: memref<9x8x4xbf16, #tpu.memory_space<vmem>>, %arg4: memref<8x1xf32, #tpu.memory_space<vmem>>, %arg5: memref<2x1024xf32, #tpu.memory_space<vmem>>, %arg6: memref<1x8x1024xbf16, #tpu.memory_space<vmem>>) attributes {dimension_semantics = [#tpu.dimension_semantics<parallel>, #tpu.dimension_semantics<parallel>], iteration_bounds = array<i64: 2, 1>, scalar_prefetch = 0 : i64, scratch_operands = 0 : i64, tpu.core_type = #tpu.core_type<tc>, window_params = [{transform_indices = @transform_0, window_bounds = array<i64: 1, 4, 1090>}, {transform_indices = @transform_1, window_bounds = array<i64: 9, 8, 4>}, {transform_indices = @transform_2, window_bounds = array<i64: 8, 1>}, {pipeline_mode = #tpu.pipeline_mode<synchronous>, transform_indices = @transform_3, window_bounds = array<i64: 2, 1024>}, {transform_indices = @transform_4, window_bounds = array<i64: 1, 8, 1024>}]} {
    %c0 = arith.constant 0 : index
    %c0_0 = arith.constant 0 : index
    %c0_1 = arith.constant 0 : index
    %0 = vector.load %arg2[%c0, %c0_0, %c0_1] : memref<1x4x1090xbf16, #tpu.memory_space<vmem>>, vector<1x4x1024xbf16>
    %1 = vector.shape_cast %0 : vector<1x4x1024xbf16> to vector<4x1024xbf16>
    %c0_2 = arith.constant 0 : index
    %c0_3 = arith.constant 0 : index
    %c0_4 = arith.constant 0 : index
    %2 = vector.load %arg3[%c0_2, %c0_3, %c0_4] : memref<9x8x4xbf16, #tpu.memory_space<vmem>>, vector<1x8x4xbf16>
    %3 = vector.shape_cast %2 : vector<1x8x4xbf16> to vector<8x4xbf16>
    %cst = arith.constant dense<0.000000e+00> : vector<8x1024xf32>
    %4 = tpu.matmul %3, %1, %cst {dimension_numbers = #tpu.dot_dimension_numbers<[1], [0], [0], [1], [0, 0, 1, 1], [], []>} : vector<8x4xbf16>, vector<4x1024xbf16>, vector<8x1024xf32> -> vector<8x1024xf32>
    %c0_5 = arith.constant 0 : index
    %c0_6 = arith.constant 0 : index
    %c32 = arith.constant 32 : index
    %5 = vector.load %arg2[%c0_5, %c0_6, %c32] : memref<1x4x1090xbf16, #tpu.memory_space<vmem>>, vector<1x4x1024xbf16>
    %6 = vector.shape_cast %5 : vector<1x4x1024xbf16> to vector<4x1024xbf16>
    %c3 = arith.constant 3 : index
    %c0_7 = arith.constant 0 : index
    %c0_8 = arith.constant 0 : index
    %7 = vector.load %arg3[%c3, %c0_7, %c0_8] : memref<9x8x4xbf16, #tpu.memory_space<vmem>>, vector<1x8x4xbf16>
    %8 = vector.shape_cast %7 : vector<1x8x4xbf16> to vector<8x4xbf16>
    %cst_9 = arith.constant dense<0.000000e+00> : vector<8x1024xf32>
    %9 = tpu.matmul %8, %6, %cst_9 {dimension_numbers = #tpu.dot_dimension_numbers<[1], [0], [0], [1], [0, 0, 1, 1], [], []>} : vector<8x4xbf16>, vector<4x1024xbf16>, vector<8x1024xf32> -> vector<8x1024xf32>
    %10 = arith.addf %4, %9 : vector<8x1024xf32>
    %c0_10 = arith.constant 0 : index
    %c0_11 = arith.constant 0 : index
    %c64 = arith.constant 64 : index
    %11 = vector.load %arg2[%c0_10, %c0_11, %c64] : memref<1x4x1090xbf16, #tpu.memory_space<vmem>>, vector<1x4x1024xbf16>
    %12 = vector.shape_cast %11 : vector<1x4x1024xbf16> to vector<4x1024xbf16>
    %c6 = arith.constant 6 : index
    %c0_12 = arith.constant 0 : index
    %c0_13 = arith.constant 0 : index
    %13 = vector.load %arg3[%c6, %c0_12, %c0_13] : memref<9x8x4xbf16, #tpu.memory_space<vmem>>, vector<1x8x4xbf16>
    %14 = vector.shape_cast %13 : vector<1x8x4xbf16> to vector<8x4xbf16>
    %cst_14 = arith.constant dense<0.000000e+00> : vector<8x1024xf32>
    %15 = tpu.matmul %14, %12, %cst_14 {dimension_numbers = #tpu.dot_dimension_numbers<[1], [0], [0], [1], [0, 0, 1, 1], [], []>} : vector<8x4xbf16>, vector<4x1024xbf16>, vector<8x1024xf32> -> vector<8x1024xf32>
    %16 = arith.addf %10, %15 : vector<8x1024xf32>
    %c0_15 = arith.constant 0 : index
    %c0_16 = arith.constant 0 : index
    %c1 = arith.constant 1 : index
    %17 = vector.load %arg2[%c0_15, %c0_16, %c1] : memref<1x4x1090xbf16, #tpu.memory_space<vmem>>, vector<1x4x1024xbf16>
    %18 = vector.shape_cast %17 : vector<1x4x1024xbf16> to vector<4x1024xbf16>
    %c1_17 = arith.constant 1 : index
    %c0_18 = arith.constant 0 : index
    %c0_19 = arith.constant 0 : index
    %19 = vector.load %arg3[%c1_17, %c0_18, %c0_19] : memref<9x8x4xbf16, #tpu.memory_space<vmem>>, vector<1x8x4xbf16>
    %20 = vector.shape_cast %19 : vector<1x8x4xbf16> to vector<8x4xbf16>
    %cst_20 = arith.constant dense<0.000000e+00> : vector<8x1024xf32>
    %21 = tpu.matmul %20, %18, %cst_20 {dimension_numbers = #tpu.dot_dimension_numbers<[1], [0], [0], [1], [0, 0, 1, 1], [], []>} : vector<8x4xbf16>, vector<4x1024xbf16>, vector<8x1024xf32> -> vector<8x1024xf32>
    %c0_21 = arith.constant 0 : index
    %c0_22 = arith.constant 0 : index
    %c33 = arith.constant 33 : index
    %22 = vector.load %arg2[%c0_21, %c0_22, %c33] : memref<1x4x1090xbf16, #tpu.memory_space<vmem>>, vector<1x4x1024xbf16>
    %23 = vector.shape_cast %22 : vector<1x4x1024xbf16> to vector<4x1024xbf16>
    %c4 = arith.constant 4 : index
    %c0_23 = arith.constant 0 : index
    %c0_24 = arith.constant 0 : index
    %24 = vector.load %arg3[%c4, %c0_23, %c0_24] : memref<9x8x4xbf16, #tpu.memory_space<vmem>>, vector<1x8x4xbf16>
    %25 = vector.shape_cast %24 : vector<1x8x4xbf16> to vector<8x4xbf16>
    %cst_25 = arith.constant dense<0.000000e+00> : vector<8x1024xf32>
    %26 = tpu.matmul %25, %23, %cst_25 {dimension_numbers = #tpu.dot_dimension_numbers<[1], [0], [0], [1], [0, 0, 1, 1], [], []>} : vector<8x4xbf16>, vector<4x1024xbf16>, vector<8x1024xf32> -> vector<8x1024xf32>
    %27 = arith.addf %21, %26 : vector<8x1024xf32>
    %c0_26 = arith.constant 0 : index
    %c0_27 = arith.constant 0 : index
    %c65 = arith.constant 65 : index
    %28 = vector.load %arg2[%c0_26, %c0_27, %c65] : memref<1x4x1090xbf16, #tpu.memory_space<vmem>>, vector<1x4x1024xbf16>
    %29 = vector.shape_cast %28 : vector<1x4x1024xbf16> to vector<4x1024xbf16>
    %c7 = arith.constant 7 : index
    %c0_28 = arith.constant 0 : index
    %c0_29 = arith.constant 0 : index
    %30 = vector.load %arg3[%c7, %c0_28, %c0_29] : memref<9x8x4xbf16, #tpu.memory_space<vmem>>, vector<1x8x4xbf16>
    %31 = vector.shape_cast %30 : vector<1x8x4xbf16> to vector<8x4xbf16>
    %cst_30 = arith.constant dense<0.000000e+00> : vector<8x1024xf32>
    %32 = tpu.matmul %31, %29, %cst_30 {dimension_numbers = #tpu.dot_dimension_numbers<[1], [0], [0], [1], [0, 0, 1, 1], [], []>} : vector<8x4xbf16>, vector<4x1024xbf16>, vector<8x1024xf32> -> vector<8x1024xf32>
    %33 = arith.addf %27, %32 : vector<8x1024xf32>
    %c0_31 = arith.constant 0 : index
    %c0_32 = arith.constant 0 : index
    %c2 = arith.constant 2 : index
    %34 = vector.load %arg2[%c0_31, %c0_32, %c2] : memref<1x4x1090xbf16, #tpu.memory_space<vmem>>, vector<1x4x1024xbf16>
    %35 = vector.shape_cast %34 : vector<1x4x1024xbf16> to vector<4x1024xbf16>
    %c2_33 = arith.constant 2 : index
    %c0_34 = arith.constant 0 : index
    %c0_35 = arith.constant 0 : index
    %36 = vector.load %arg3[%c2_33, %c0_34, %c0_35] : memref<9x8x4xbf16, #tpu.memory_space<vmem>>, vector<1x8x4xbf16>
    %37 = vector.shape_cast %36 : vector<1x8x4xbf16> to vector<8x4xbf16>
    %cst_36 = arith.constant dense<0.000000e+00> : vector<8x1024xf32>
    %38 = tpu.matmul %37, %35, %cst_36 {dimension_numbers = #tpu.dot_dimension_numbers<[1], [0], [0], [1], [0, 0, 1, 1], [], []>} : vector<8x4xbf16>, vector<4x1024xbf16>, vector<8x1024xf32> -> vector<8x1024xf32>
    %c0_37 = arith.constant 0 : index
    %c0_38 = arith.constant 0 : index
    %c34 = arith.constant 34 : index
    %39 = vector.load %arg2[%c0_37, %c0_38, %c34] : memref<1x4x1090xbf16, #tpu.memory_space<vmem>>, vector<1x4x1024xbf16>
    %40 = vector.shape_cast %39 : vector<1x4x1024xbf16> to vector<4x1024xbf16>
    %c5 = arith.constant 5 : index
    %c0_39 = arith.constant 0 : index
    %c0_40 = arith.constant 0 : index
    %41 = vector.load %arg3[%c5, %c0_39, %c0_40] : memref<9x8x4xbf16, #tpu.memory_space<vmem>>, vector<1x8x4xbf16>
    %42 = vector.shape_cast %41 : vector<1x8x4xbf16> to vector<8x4xbf16>
    %cst_41 = arith.constant dense<0.000000e+00> : vector<8x1024xf32>
    %43 = tpu.matmul %42, %40, %cst_41 {dimension_numbers = #tpu.dot_dimension_numbers<[1], [0], [0], [1], [0, 0, 1, 1], [], []>} : vector<8x4xbf16>, vector<4x1024xbf16>, vector<8x1024xf32> -> vector<8x1024xf32>
    %44 = arith.addf %38, %43 : vector<8x1024xf32>
    %c0_42 = arith.constant 0 : index
    %c0_43 = arith.constant 0 : index
    %c66 = arith.constant 66 : index
    %45 = vector.load %arg2[%c0_42, %c0_43, %c66] : memref<1x4x1090xbf16, #tpu.memory_space<vmem>>, vector<1x4x1024xbf16>
    %46 = vector.shape_cast %45 : vector<1x4x1024xbf16> to vector<4x1024xbf16>
    %c8 = arith.constant 8 : index
    %c0_44 = arith.constant 0 : index
    %c0_45 = arith.constant 0 : index
    %47 = vector.load %arg3[%c8, %c0_44, %c0_45] : memref<9x8x4xbf16, #tpu.memory_space<vmem>>, vector<1x8x4xbf16>
    %48 = vector.shape_cast %47 : vector<1x8x4xbf16> to vector<8x4xbf16>
    %cst_46 = arith.constant dense<0.000000e+00> : vector<8x1024xf32>
    %49 = tpu.matmul %48, %46, %cst_46 {dimension_numbers = #tpu.dot_dimension_numbers<[1], [0], [0], [1], [0, 0, 1, 1], [], []>} : vector<8x4xbf16>, vector<4x1024xbf16>, vector<8x1024xf32> -> vector<8x1024xf32>
    %50 = arith.addf %44, %49 : vector<8x1024xf32>
    %c0_47 = arith.constant 0 : index
    %c0_48 = arith.constant 0 : index
    %51 = vector.load %arg5[%c0_47, %c0_48] : memref<2x1024xf32, #tpu.memory_space<vmem>>, vector<1x1024xf32>
    %52 = vector.broadcast %51 : vector<1x1024xf32> to vector<8x1024xf32>
    %53 = arith.mulf %16, %52 : vector<8x1024xf32>
    %54 = arith.addf %33, %53 : vector<8x1024xf32>
    %c1_49 = arith.constant 1 : index
    %c0_50 = arith.constant 0 : index
    %55 = vector.load %arg5[%c1_49, %c0_50] : memref<2x1024xf32, #tpu.memory_space<vmem>>, vector<1x1024xf32>
    %56 = vector.broadcast %55 : vector<1x1024xf32> to vector<8x1024xf32>
    %57 = arith.mulf %50, %56 : vector<8x1024xf32>
    %58 = arith.addf %54, %57 : vector<8x1024xf32>
    %c0_51 = arith.constant 0 : index
    %c0_52 = arith.constant 0 : index
    %59 = vector.load %arg4[%c0_51, %c0_52] : memref<8x1xf32, #tpu.memory_space<vmem>>, vector<8x1xf32>
    %60 = vector.broadcast %59 : vector<8x1xf32> to vector<8x1024xf32>
    %61 = arith.addf %58, %60 : vector<8x1024xf32>
    %cst_53 = arith.constant 2.000000e-01 : f32
    %62 = vector.broadcast %cst_53 : f32 to vector<8x1024xf32>
    %63 = arith.mulf %62, %61 : vector<8x1024xf32>
    %64 = arith.maximumf %61, %63 : vector<8x1024xf32>
    %65 = arith.truncf %64 : vector<8x1024xf32> to vector<8x1024xbf16>
    %c0_54 = arith.constant 0 : index
    %c0_55 = arith.constant 0 : index
    %c0_56 = arith.constant 0 : index
    %66 = vector.load %arg6[%c0_54, %c0_55, %c0_56] : memref<1x8x1024xbf16, #tpu.memory_space<vmem>>, vector<1x8x1024xbf16>
    %67 = vector.shape_cast %66 : vector<1x8x1024xbf16> to vector<8x1024xbf16>
    %68 = vector.shape_cast %65 : vector<8x1024xbf16> to vector<1x8x1024xbf16>
    tpu.vector_store %arg6[%c0_54, %c0_55, %c0_56], %68 {strides = array<i32>} : memref<1x8x1024xbf16, #tpu.memory_space<vmem>>, vector<1x8x1024xbf16>,
    return
  }
  func.func @transform_0(%arg0: i32, %arg1: i32) -> (i32, i32, i32) {
    %c0_i32 = arith.constant 0 : i32
    %c0_i32_0 = arith.constant 0 : i32
    %c0_i32_1 = arith.constant 0 : i32
    return %arg0, %c0_i32, %c0_i32_0 : i32, i32, i32
  }
  func.func @transform_1(%arg0: i32, %arg1: i32) -> (i32, i32, i32) {
    %c0_i32 = arith.constant 0 : i32
    %c0_i32_0 = arith.constant 0 : i32
    %c0_i32_1 = arith.constant 0 : i32
    return %c0_i32, %arg1, %c0_i32_0 : i32, i32, i32
  }
  func.func @transform_2(%arg0: i32, %arg1: i32) -> (i32, i32) {
    %c0_i32 = arith.constant 0 : i32
    %c0_i32_0 = arith.constant 0 : i32
    return %arg1, %c0_i32 : i32, i32
  }
  func.func @transform_3(%arg0: i32, %arg1: i32) -> (i32, i32) {
    %c0_i32 = arith.constant 0 : i32
    %c0_i32_0 = arith.constant 0 : i32
    %c0_i32_1 = arith.constant 0 : i32
    return %c0_i32, %c0_i32_0 : i32, i32
  }
  func.func @transform_4(%arg0: i32, %arg1: i32) -> (i32, i32, i32) {
    %c0_i32 = arith.constant 0 : i32
    %c0_i32_0 = arith.constant 0 : i32
    return %arg0, %arg1, %c0_i32 : i32, i32, i32
  }
}

</mosaic_0001>

<llo_original>
// kernel: tpu_custom_call.1
$region0: #{tpu_custom_call.1}
  #allocation0 [shape = 'u32[]', space=smem, size = 0x4, offset = 0x4, fixed_abs, tag = 'smem constant byte address 0x4 - core index']
  #allocation1 [shape = 'u32[72,128]{1,0:T(1,128)}', space=vmem, size = 0x9000, scoped, tag = 'internal scratch']
  %s0 = inlined_call_operand.vmem [shape: bf16[2,4,1090], index: 0, kind: input, shape index: {}]
  %s1 = inlined_call_operand.vmem [shape: bf16[9,8,4], index: 1, kind: input, shape index: {}]
  %s2 = inlined_call_operand.vmem [shape: f32[8,1], index: 2, kind: input, shape index: {}]
  %s3 = inlined_call_operand.vmem [shape: f32[2,1024], index: 3, kind: input, shape index: {}]
  %s4 = inlined_call_operand.hbm [shape: bf16[2,8,1024], index: 4, kind: output, shape index: {}]
  %s5 = sld [smem:[#allocation0]]
  $region49: #{tpu_custom_call.1} parent=0
    _
  %s7 = ssub.s32 1, %s5
  %s8 = scalar_select 0, %s7, %s5
  $region1: #{tpu_custom_call.1} parent=0
    #allocation2 [shape = 'u8[32768]{0}', space=vmem, size = 0x8000, scoped, tag = 'output window, operand 0']
    #allocation3 [shape = 's32[2]{0}', space=sflag, size = 0x8, scoped, tag = 'scoped memory for tpu_custom_call.1']
    %9 = vsyncpa [#allocation3], 0
    %s10 = scalar_lea.sflag [#allocation3], 1
    %11 = vsyncpa %s10, 0
    loop: start=0, step=1, limit=4
    $region2: #{tpu_custom_call.1} parent=1 // loop_pre_header
      _
    $region3: #{tpu_custom_call.1} parent=1 // loop_header
      %s13 = sphi 0, %s17
      %p14 = scmp.ge.s32.totalorder %s13, 4
      %s20 = sphi 0, %s32
      %s21 = sphi 0, %s28
      %s22 = sphi 0, %s20
      %s23 = sphi 0, %s21
      %s24 = sphi 0, %s22
      %s25 = sphi 0, %s23
      %s35 = sphi 0, %s37
      %s38 = sphi 0, %s35
      %s39 = sphi 0, %s38
      %s55 = sphi 0, %s39
      %s61 = sphi 0, %s63
      %s64 = sphi 0, %s61
      %s65 = sphi 0, %s64
      %s81 = sphi 0, %s65
      %s87 = sphi 0, %s89
      %s90 = sphi 0, %s87
      %s91 = sphi 0, %s90
      %s107 = sphi 0, %s91
      %s111 = sphi 0, %s111
      %s113 = sphi 0, %s111
      %s114 = sphi 0, %s113
      %s128 = sphi 0, %s114
      %s136 = sphi 0, %s138
      %s139 = sphi 0, %s136
      %s140 = sphi 0, %s139
      %s156 = sphi 0, %s140
    $region4: #{tpu_custom_call.1} parent=1 // loop_header_branch
      %16 = sbr.rel (%p14) target = $region8
    $region5: #{tpu_custom_call.1} parent=1 // loop_body
      %s18 = ssub.s32 %s13, 1
      %s19 = ssub.s32 %s13, 2
      %s26 = sadd.s32 1, %s21
      %p27 = scmp.ge.s32.totalorder %s26, 1
      %s28 = scalar_select %p27, 0, %s26
      %s29 = sadd.s32 1, %s20
      %s30 = scalar_select %p27, %s29, %s20
      %p31 = scmp.ge.s32.totalorder %s30, 2
      %s32 = scalar_select %p31, 0, %s30
      %s33 = ssub.s32 %s20, %s32
      %p34 = scmp.eq.s32.totalorder %s33, 0
      %s36 = sadd.s32 %s35, 1
      %s37 = scalar_select %p34, %s35, %s36
      %p40 = pneg %p34
      %p41 = scmp.eq.s32.totalorder %s13, 1
      %p42 = por %p40, %p41
      %p43 = scmp.ne.s32.totalorder %s35, %s38
      %p44 = scmp.eq.s32.totalorder %s13, 0
      %p45 = por %p43, %p44
      %p46 = scmp.ne.s32.totalorder %s35, %s38
      %p47 = scmp.eq.s32.totalorder %s18, 1
      %p48 = por %p46, %p47
      %p49 = scmp.ne.s32.totalorder %s38, %s39
      %p50 = scmp.eq.s32.totalorder %s18, 0
      %p51 = por %p49, %p50
      %p52 = scmp.ne.s32.totalorder %s38, %s39
      %p53 = scmp.eq.s32.totalorder %s19, 1
      %p54 = por %p52, %p53
      %p56 = scmp.ne.s32.totalorder %s39, %s55
      %p57 = scmp.eq.s32.totalorder %s19, 0
      %p58 = por %p56, %p57
      %s59 = ssub.s32 %s21, %s28
      %p60 = scmp.eq.s32.totalorder %s59, 0
      %s62 = sadd.s32 %s61, 1
      %s63 = scalar_select %p60, %s61, %s62
      %p66 = pneg %p60
      %p67 = scmp.eq.s32.totalorder %s13, 1
      %p68 = por %p66, %p67
      %p69 = scmp.ne.s32.totalorder %s61, %s64
      %p70 = scmp.eq.s32.totalorder %s13, 0
      %p71 = por %p69, %p70
      %p72 = scmp.ne.s32.totalorder %s61, %s64
      %p73 = scmp.eq.s32.totalorder %s18, 1
      %p74 = por %p72, %p73
      %p75 = scmp.ne.s32.totalorder %s64, %s65
      %p76 = scmp.eq.s32.totalorder %s18, 0
      %p77 = por %p75, %p76
      %p78 = scmp.ne.s32.totalorder %s64, %s65
      %p79 = scmp.eq.s32.totalorder %s19, 1
      %p80 = por %p78, %p79
      %p82 = scmp.ne.s32.totalorder %s65, %s81
      %p83 = scmp.eq.s32.totalorder %s19, 0
      %p84 = por %p82, %p83
      %s85 = ssub.s32 %s21, %s28
      %p86 = scmp.eq.s32.totalorder %s85, 0
      %s88 = sadd.s32 %s87, 1
      %s89 = scalar_select %p86, %s87, %s88
      %p92 = pneg %p86
      %p93 = scmp.eq.s32.totalorder %s13, 1
      %p94 = por %p92, %p93
      %p95 = scmp.ne.s32.totalorder %s87, %s90
      %p96 = scmp.eq.s32.totalorder %s13, 0
      %p97 = por %p95, %p96
      %p98 = scmp.ne.s32.totalorder %s87, %s90
      %p99 = scmp.eq.s32.totalorder %s18, 1
      %p100 = por %p98, %p99
      %p101 = scmp.ne.s32.totalorder %s90, %s91
      %p102 = scmp.eq.s32.totalorder %s18, 0
      %p103 = por %p101, %p102
      %p104 = scmp.ne.s32.totalorder %s90, %s91
      %p105 = scmp.eq.s32.totalorder %s19, 1
      %p106 = por %p104, %p105
      %p108 = scmp.ne.s32.totalorder %s91, %s107
      %p109 = scmp.eq.s32.totalorder %s19, 0
      %p110 = por %p108, %p109
      %s112 = sadd.s32 %s111, 1
      %p115 = scmp.eq.s32.totalorder %s13, 1
      %p116 = scmp.ne.s32.totalorder %s111, %s113
      %p117 = scmp.eq.s32.totalorder %s13, 0
      %p118 = por %p116, %p117
      %p119 = scmp.ne.s32.totalorder %s111, %s113
      %p120 = scmp.eq.s32.totalorder %s18, 1
      %p121 = por %p119, %p120
      %p122 = scmp.ne.s32.totalorder %s113, %s114
      %p123 = scmp.eq.s32.totalorder %s18, 0
      %p124 = por %p122, %p123
      %p125 = scmp.ne.s32.totalorder %s113, %s114
      %p126 = scmp.eq.s32.totalorder %s19, 1
      %p127 = por %p125, %p126
      %p129 = scmp.ne.s32.totalorder %s114, %s128
      %p130 = scmp.eq.s32.totalorder %s19, 0
      %p131 = por %p129, %p130
      %s132 = ssub.s32 %s20, %s32
      %s133 = ssub.s32 %s21, %s28
      %s134 = sor.u32 %s132, %s133
      %p135 = scmp.eq.s32.totalorder %s134, 0
      %s137 = sadd.s32 %s136, 1
      %s138 = scalar_select %p135, %s136, %s137
      %p141 = pneg %p135
      %p142 = scmp.eq.s32.totalorder %s13, 1
      %p143 = por %p141, %p142
      %p144 = scmp.ne.s32.totalorder %s136, %s139
      %p145 = scmp.eq.s32.totalorder %s13, 0
      %p146 = por %p144, %p145
      %p147 = scmp.ne.s32.totalorder %s136, %s139
      %p148 = scmp.eq.s32.totalorder %s18, 1
      %p149 = por %p147, %p148
      %p150 = scmp.ne.s32.totalorder %s139, %s140
      %p151 = scmp.eq.s32.totalorder %s18, 0
      %p152 = por %p150, %p151
      %p153 = scmp.ne.s32.totalorder %s139, %s140
      %p154 = scmp.eq.s32.totalorder %s19, 1
      %p155 = por %p153, %p154
      %p157 = scmp.ne.s32.totalorder %s140, %s156
      %p158 = scmp.eq.s32.totalorder %s19, 0
      %p159 = por %p157, %p158
      %p160 = scmp.le.s32.totalorder 1, %s13
      %p161 = scmp.lt.s32.totalorder %s13, 3
      %p162 = pnand %p160, %p161
      %p163 = pneg %p162
      // Predicated region
      $region9: #{tpu_custom_call.1} parent=5 // pred_check
        _
      $region10: #{tpu_custom_call.1} parent=5 // pred_check_branch
        %165 = sbr.rel (%p162) target = $region12
      $region11: #{tpu_custom_call.1} parent=5 // pred_region
        %s166 = ssub.s32 %s13, 1
        // Predicated region
        $region13: #{tpu_custom_call.1} parent=11 // pred_check
          %p167 = pneg %p77
        $region14: #{tpu_custom_call.1} parent=11 // pred_check_branch
          %169 = sbr.rel (%p167) target = $region16
        $region15: #{tpu_custom_call.1} parent=11 // pred_region
          %p170 = scmp.lt.s32.totalorder %s23, 0
          %s171 = scalar_select %p170, %s23, 0
          %s172 = smul.addr %s171, 4
          %s173 = scalar_lea.vmem %s1, %s172
        $region16: #{tpu_custom_call.1} parent=11 // pred_fallthru
          _
        // Predicated region
        $region17: #{tpu_custom_call.1} parent=11 // pred_check
          %p174 = pneg %p103
        $region18: #{tpu_custom_call.1} parent=11 // pred_check_branch
          %176 = sbr.rel (%p174) target = $region20
        $region19: #{tpu_custom_call.1} parent=11 // pred_region
          %p177 = scmp.lt.s32.totalorder %s23, 0
          %s178 = scalar_select %p177, %s23, 0
          %s179 = smul.addr %s178, 8
          %s180 = scalar_lea.vmem %s2, %s179
        $region20: #{tpu_custom_call.1} parent=11 // pred_fallthru
          _
        // Predicated region
        $region21: #{tpu_custom_call.1} parent=11 // pred_check
          %p181 = pneg %p124
        $region22: #{tpu_custom_call.1} parent=11 // pred_check_branch
          %183 = sbr.rel (%p181) target = $region24
        $region23: #{tpu_custom_call.1} parent=11 // pred_region
          _
        $region24: #{tpu_custom_call.1} parent=11 // pred_fallthru
          _
      $region12: #{tpu_custom_call.1} parent=5 // pred_fallthru
        _
      %p184 = scmp.lt.s32.totalorder %s13, 2
      // Predicated region
      $region25: #{tpu_custom_call.1} parent=5 // pred_check
        %p185 = pneg %p184
      $region26: #{tpu_custom_call.1} parent=5 // pred_check_branch
        %187 = sbr.rel (%p185) target = $region28
      $region27: #{tpu_custom_call.1} parent=5 // pred_region
        // Predicated region
        $region29: #{tpu_custom_call.1} parent=27 // pred_check
          %p188 = pneg %p45
        $region30: #{tpu_custom_call.1} parent=27 // pred_check_branch
          %190 = sbr.rel (%p188) target = $region32
        $region31: #{tpu_custom_call.1} parent=27 // pred_region
          %p191 = scmp.lt.s32.totalorder %s20, 1
          %s192 = scalar_select %p191, %s20, 1
          %s193 = smul.addr %s192, 9
          %s194 = smul.addr %s193, 2
          %s195 = scalar_lea.vmem %s0, %s194
        $region32: #{tpu_custom_call.1} parent=27 // pred_fallthru
          _
      $region28: #{tpu_custom_call.1} parent=5 // pred_fallthru
        _
      %p196 = scmp.le.s32.totalorder 1, %s13
      %p197 = scmp.lt.s32.totalorder %s13, 3
      %p198 = pnand %p196, %p197
      %p199 = pneg %p198
      // Predicated region
      $region33: #{tpu_custom_call.1} parent=5 // pred_check
        _
      $region34: #{tpu_custom_call.1} parent=5 // pred_check_branch
        %201 = sbr.rel (%p198) target = $region36
      $region35: #{tpu_custom_call.1} parent=5 // pred_region
        %s202 = ssub.s32 %s13, 1
        %p203 = scmp.lt.s32.totalorder %s22, 1
        %s204 = scalar_select %p203, %s22, 1
        %s205 = smul.addr %s204, 9
        %s206 = smul.addr %s205, 2
        %s207 = scalar_lea.vmem %s0, %s206
        %p208 = pneg %p51
        %p209 = pneg %p48
        %p210 = scmp.lt.s32.totalorder %s23, 0
        %s211 = scalar_select %p210, %s23, 0
        %s212 = smul.addr %s211, 4
        %s213 = scalar_lea.vmem %s1, %s212
        %p214 = pneg %p77
        %p215 = pneg %p74
        %p216 = scmp.lt.s32.totalorder %s23, 0
        %s217 = scalar_select %p216, %s23, 0
        %s218 = smul.addr %s217, 8
        %s219 = scalar_lea.vmem %s2, %s218
        %p220 = pneg %p103
        %p221 = pneg %p100
        %p222 = pneg %p124
        %p223 = pneg %p121
        %p224 = pneg %p152
        %p225 = pneg %p149
        %s226 = sand.u32 %s139, 1
        %s227 = scalar_lea.sflag [#allocation3], %s226
        %s228 = sand.u32 %s139, 1
        %s229 = smul.addr %s228, 32
        %s230 = scalar_lea.vmem [#allocation2], %s229
        %p231 = scmp.lt.s32.totalorder %s22, 1
        %s232 = scalar_select %p231, %s22, 1
        %s233 = smul.addr %s232, 9
        %s234 = smul.addr %s233, 2
        %s235 = scalar_lea.vmem %s0, %s234
        %p236 = scmp.lt.s32.totalorder %s23, 0
        %s237 = scalar_select %p236, %s23, 0
        %s238 = smul.addr %s237, 4
        %s239 = scalar_lea.vmem %s1, %s238
        %p240 = scmp.lt.s32.totalorder %s23, 0
        %s241 = scalar_select %p240, %s23, 0
        %s242 = smul.addr %s241, 8
        %s243 = scalar_lea.vmem %s2, %s242
        %v245 = vld [vmem:[%s235] sm:$0xff]
        %v246 = vld [vmem:[%s235 + $0x8] sm:$0xff]
        %v247 = vld [vmem:[%s239] sm:$0xf]
        %v248 = vld [vmem:[%s235 + $0x10] sm:$0x3]
        %s249 = scalar_lea.vmem %s239, 12
        %v250 = vld [vmem:[%s249] sm:$0xf]
        %252 = vst [vmem:[#allocation1] ss:$4 sm:$0xff] %v245
        %s254 = scalar_lea.vmem [#allocation1], 32
        %255 = vst [vmem:[%s254] ss:$4 sm:$0xff] %v246
        %v256 = vld.sshfl [vmem:[#allocation1] sm:$0xff pattern:$0x73625140]
        %v258 = vld.sshfl [vmem:[#allocation1 + $0x8] sm:$0xff pattern:$0x73625140]
        %v260 = vld.sshfl [vmem:[#allocation1 + $0x10] sm:$0xff pattern:$0x73625140]
        %v262 = vld.sshfl [vmem:[#allocation1 + $0x18] sm:$0xff pattern:$0x73625140]
        %v264 = vld.sshfl [vmem:[#allocation1 + $0x20] sm:$0xff pattern:$0x73625140]
        %v266 = vld.sshfl [vmem:[#allocation1 + $0x28] sm:$0xff pattern:$0x73625140]
        %v268 = vld.sshfl [vmem:[#allocation1 + $0x30] sm:$0xff pattern:$0x73625140]
        %v270 = vld.sshfl [vmem:[#allocation1 + $0x38] sm:$0xff pattern:$0x73625140]
        %273 = vst [vmem:[#allocation1] ss:$4 sm:$0xff] %v248
        %v274 = vld.sshfl [vmem:[#allocation1] sm:$0xff pattern:$0x73625140]
        %276 = vrot.lane.b32.xlu0 %v256, 96
        %v277 = vpop.permute.xlu0 %276
        %278 = vrot.lane.b32.xlu0 %v258, 96
        %v279 = vpop.permute.xlu0 %278
        %280 = vrot.lane.b32.xlu0 %v260, 96
        %v281 = vpop.permute.xlu0 %280
        %282 = vrot.lane.b32.xlu0 %v262, 96
        %v283 = vpop.permute.xlu0 %282
        %284 = vrot.lane.b32.xlu0 %v264, 96
        %v285 = vpop.permute.xlu0 %284
        %286 = vrot.lane.b32.xlu0 %v266, 96
        %v287 = vpop.permute.xlu0 %286
        %288 = vrot.lane.b32.xlu0 %v268, 96
        %v289 = vpop.permute.xlu0 %288
        %290 = vrot.lane.b32.xlu0 %v270, 96
        %v291 = vpop.permute.xlu0 %290
        %292 = vrot.lane.b32.xlu0 %v274, 96
        %v293 = vpop.permute.xlu0 %292
        %vm294 = vcmask 785408
        %v295 = vsel %vm294, %v277, %v279
        %v296 = vsel %vm294, %v279, %v281
        %v297 = vsel %vm294, %v281, %v283
        %v298 = vsel %vm294, %v283, %v285
        %v299 = vsel %vm294, %v285, %v287
        %v300 = vsel %vm294, %v287, %v289
        %v301 = vsel %vm294, %v289, %v291
        %v302 = vsel %vm294, %v291, %v293
        %vm303 = vcmask 31744
        %v305 = vsel %vm303, %v250, 0
        %vm307 = vcmask 1041408
        %v309 = vsel %vm307, %v295, 0
        %v312 = vsel %vm307, %v296, 0
        %v315 = vsel %vm307, %v297, 0
        %v318 = vsel %vm307, %v298, 0
        %v321 = vsel %vm307, %v299, 0
        %v324 = vsel %vm307, %v300, 0
        %v327 = vsel %vm307, %v301, 0
        %v330 = vsel %vm307, %v302, 0
        %332 = vmatpush.bf16.msra.mxu0 0
        %333 = vmatpush.bf16.msra.mxu0 0
        %334 = vmatpush.bf16.msra.mxu0 0
        %335 = vmatpush.bf16.msra.mxu0 0
        %336 = vmatpush.bf16.msra.mxu0 0
        %337 = vmatpush.bf16.msra.mxu0 0
        %338 = vmatpush.bf16.msra.mxu0 0
        %339 = vmatpush.bf16.msra.mxu0 %v309
        %340 = vmatmul.bf16.gmra.mxu0 %v305
        %v341 = vpop.f32.mrf.mxu0
        %v342 = vadd.f32 0.0, %v341
        %v343 = vpop.f32.mrf.mxu0
        %344 = vdwg.mxu0
        %345 = vmatpush.bf16.msra.mxu0 0
        %346 = vmatpush.bf16.msra.mxu0 0
        %347 = vmatpush.bf16.msra.mxu0 0
        %348 = vmatpush.bf16.msra.mxu0 0
        %349 = vmatpush.bf16.msra.mxu0 0
        %350 = vmatpush.bf16.msra.mxu0 0
        %351 = vmatpush.bf16.msra.mxu0 0
        %352 = vmatpush.bf16.msra.mxu0 %v312
        %353 = vmatmul.bf16.gmra.mxu0 %v305
        %v354 = vpop.f32.mrf.mxu0
        %v355 = vadd.f32 0.0, %v354
        %v356 = vpop.f32.mrf.mxu0
        %357 = vdwg.mxu0
        %358 = vmatpush.bf16.msra.mxu0 0
        %359 = vmatpush.bf16.msra.mxu0 0
        %360 = vmatpush.bf16.msra.mxu0 0
        %361 = vmatpush.bf16.msra.mxu0 0
        %362 = vmatpush.bf16.msra.mxu0 0
        %363 = vmatpush.bf16.msra.mxu0 0
        %364 = vmatpush.bf16.msra.mxu0 0
        %365 = vmatpush.bf16.msra.mxu0 %v315
        %366 = vmatmul.bf16.gmra.mxu0 %v305
        %v367 = vpop.f32.mrf.mxu0
        %v368 = vadd.f32 0.0, %v367
        %v369 = vpop.f32.mrf.mxu0
        %370 = vdwg.mxu0
        %371 = vmatpush.bf16.msra.mxu0 0
        %372 = vmatpush.bf16.msra.mxu0 0
        %373 = vmatpush.bf16.msra.mxu0 0
        %374 = vmatpush.bf16.msra.mxu0 0
        %375 = vmatpush.bf16.msra.mxu0 0
        %376 = vmatpush.bf16.msra.mxu0 0
        %377 = vmatpush.bf16.msra.mxu0 0
        %378 = vmatpush.bf16.msra.mxu0 %v318
        %379 = vmatmul.bf16.gmra.mxu0 %v305
        %v380 = vpop.f32.mrf.mxu0
        %v381 = vadd.f32 0.0, %v380
        %v382 = vpop.f32.mrf.mxu0
        %383 = vdwg.mxu0
        %384 = vmatpush.bf16.msra.mxu0 0
        %385 = vmatpush.bf16.msra.mxu0 0
        %386 = vmatpush.bf16.msra.mxu0 0
        %387 = vmatpush.bf16.msra.mxu0 0
        %388 = vmatpush.bf16.msra.mxu0 0
        %389 = vmatpush.bf16.msra.mxu0 0
        %390 = vmatpush.bf16.msra.mxu0 0
        %391 = vmatpush.bf16.msra.mxu0 %v321
        %392 = vmatmul.bf16.gmra.mxu0 %v305
        %v393 = vpop.f32.mrf.mxu0
        %v394 = vadd.f32 0.0, %v393
        %v395 = vpop.f32.mrf.mxu0
        %396 = vdwg.mxu0
        %397 = vmatpush.bf16.msra.mxu0 0
        %398 = vmatpush.bf16.msra.mxu0 0
        %399 = vmatpush.bf16.msra.mxu0 0
        %400 = vmatpush.bf16.msra.mxu0 0
        %401 = vmatpush.bf16.msra.mxu0 0
        %402 = vmatpush.bf16.msra.mxu0 0
        %403 = vmatpush.bf16.msra.mxu0 0
        %404 = vmatpush.bf16.msra.mxu0 %v324
        %405 = vmatmul.bf16.gmra.mxu0 %v305
        %v406 = vpop.f32.mrf.mxu0
        %v407 = vadd.f32 0.0, %v406
        %v408 = vpop.f32.mrf.mxu0
        %409 = vdwg.mxu0
        %410 = vmatpush.bf16.msra.mxu0 0
        %411 = vmatpush.bf16.msra.mxu0 0
        %412 = vmatpush.bf16.msra.mxu0 0
        %413 = vmatpush.bf16.msra.mxu0 0
        %414 = vmatpush.bf16.msra.mxu0 0
        %415 = vmatpush.bf16.msra.mxu0 0
        %416 = vmatpush.bf16.msra.mxu0 0
        %417 = vmatpush.bf16.msra.mxu0 %v327
        %418 = vmatmul.bf16.gmra.mxu0 %v305
        %v419 = vpop.f32.mrf.mxu0
        %v420 = vadd.f32 0.0, %v419
        %v421 = vpop.f32.mrf.mxu0
        %422 = vdwg.mxu0
        %423 = vmatpush.bf16.msra.mxu0 0
        %424 = vmatpush.bf16.msra.mxu0 0
        %425 = vmatpush.bf16.msra.mxu0 0
        %426 = vmatpush.bf16.msra.mxu0 0
        %427 = vmatpush.bf16.msra.mxu0 0
        %428 = vmatpush.bf16.msra.mxu0 0
        %429 = vmatpush.bf16.msra.mxu0 0
        %430 = vmatpush.bf16.msra.mxu0 %v330
        %431 = vmatmul.bf16.gmra.mxu0 %v305
        %v432 = vpop.f32.mrf.mxu0
        %v433 = vadd.f32 0.0, %v432
        %v434 = vpop.f32.mrf.mxu0
        %435 = vdwg.mxu0
        %436 = vst [vmem:[#allocation1] ss:$4 sm:$0xff] %v245
        %s437 = scalar_lea.vmem [#allocation1], 32
        %438 = vst [vmem:[%s437] ss:$4 sm:$0xff] %v246
        %v439 = vld.sshfl [vmem:[#allocation1] sm:$0xff pattern:$0x73625140]
        %v440 = vld.sshfl [vmem:[#allocation1 + $0x8] sm:$0xff pattern:$0x73625140]
        %v441 = vld.sshfl [vmem:[#allocation1 + $0x10] sm:$0xff pattern:$0x73625140]
        %v442 = vld.sshfl [vmem:[#allocation1 + $0x18] sm:$0xff pattern:$0x73625140]
        %v443 = vld.sshfl [vmem:[#allocation1 + $0x20] sm:$0xff pattern:$0x73625140]
        %v444 = vld.sshfl [vmem:[#allocation1 + $0x28] sm:$0xff pattern:$0x73625140]
        %v445 = vld.sshfl [vmem:[#allocation1 + $0x30] sm:$0xff pattern:$0x73625140]
        %v446 = vld.sshfl [vmem:[#allocation1 + $0x38] sm:$0xff pattern:$0x73625140]
        %v448 = vsel %vm303, %v247, 0
        %v450 = vsel %vm307, %v439, 0
        %v452 = vsel %vm307, %v440, 0
        %v454 = vsel %vm307, %v441, 0
        %v456 = vsel %vm307, %v442, 0
        %v458 = vsel %vm307, %v443, 0
        %v460 = vsel %vm307, %v444, 0
        %v462 = vsel %vm307, %v445, 0
        %v464 = vsel %vm307, %v446, 0
        %466 = vmatpush.bf16.msra.mxu0 0
        %467 = vmatpush.bf16.msra.mxu0 0
        %468 = vmatpush.bf16.msra.mxu0 0
        %469 = vmatpush.bf16.msra.mxu0 0
        %470 = vmatpush.bf16.msra.mxu0 0
        %471 = vmatpush.bf16.msra.mxu0 0
        %472 = vmatpush.bf16.msra.mxu0 0
        %473 = vmatpush.bf16.msra.mxu0 %v450
        %474 = vmatmul.bf16.gmra.mxu0 %v448
        %v475 = vpop.f32.mrf.mxu0
        %v476 = vadd.f32 %v342, %v475
        %v477 = vpop.f32.mrf.mxu0
        %478 = vdwg.mxu0
        %479 = vmatpush.bf16.msra.mxu0 0
        %480 = vmatpush.bf16.msra.mxu0 0
        %481 = vmatpush.bf16.msra.mxu0 0
        %482 = vmatpush.bf16.msra.mxu0 0
        %483 = vmatpush.bf16.msra.mxu0 0
        %484 = vmatpush.bf16.msra.mxu0 0
        %485 = vmatpush.bf16.msra.mxu0 0
        %486 = vmatpush.bf16.msra.mxu0 %v452
        %487 = vmatmul.bf16.gmra.mxu0 %v448
        %v488 = vpop.f32.mrf.mxu0
        %v489 = vadd.f32 %v355, %v488
        %v490 = vpop.f32.mrf.mxu0
        %491 = vdwg.mxu0
        %492 = vmatpush.bf16.msra.mxu0 0
        %493 = vmatpush.bf16.msra.mxu0 0
        %494 = vmatpush.bf16.msra.mxu0 0
        %495 = vmatpush.bf16.msra.mxu0 0
        %496 = vmatpush.bf16.msra.mxu0 0
        %497 = vmatpush.bf16.msra.mxu0 0
        %498 = vmatpush.bf16.msra.mxu0 0
        %499 = vmatpush.bf16.msra.mxu0 %v454
        %500 = vmatmul.bf16.gmra.mxu0 %v448
        %v501 = vpop.f32.mrf.mxu0
        %v502 = vadd.f32 %v368, %v501
        %v503 = vpop.f32.mrf.mxu0
        %504 = vdwg.mxu0
        %505 = vmatpush.bf16.msra.mxu0 0
        %506 = vmatpush.bf16.msra.mxu0 0
        %507 = vmatpush.bf16.msra.mxu0 0
        %508 = vmatpush.bf16.msra.mxu0 0
        %509 = vmatpush.bf16.msra.mxu0 0
        %510 = vmatpush.bf16.msra.mxu0 0
        %511 = vmatpush.bf16.msra.mxu0 0
        %512 = vmatpush.bf16.msra.mxu0 %v456
        %513 = vmatmul.bf16.gmra.mxu0 %v448
        %v514 = vpop.f32.mrf.mxu0
        %v515 = vadd.f32 %v381, %v514
        %v516 = vpop.f32.mrf.mxu0
        %517 = vdwg.mxu0
        %518 = vmatpush.bf16.msra.mxu0 0
        %519 = vmatpush.bf16.msra.mxu0 0
        %520 = vmatpush.bf16.msra.mxu0 0
        %521 = vmatpush.bf16.msra.mxu0 0
        %522 = vmatpush.bf16.msra.mxu0 0
        %523 = vmatpush.bf16.msra.mxu0 0
        %524 = vmatpush.bf16.msra.mxu0 0
        %525 = vmatpush.bf16.msra.mxu0 %v458
        %526 = vmatmul.bf16.gmra.mxu0 %v448
        %v527 = vpop.f32.mrf.mxu0
        %v528 = vadd.f32 %v394, %v527
        %v529 = vpop.f32.mrf.mxu0
        %530 = vdwg.mxu0
        %531 = vmatpush.bf16.msra.mxu0 0
        %532 = vmatpush.bf16.msra.mxu0 0
        %533 = vmatpush.bf16.msra.mxu0 0
        %534 = vmatpush.bf16.msra.mxu0 0
        %535 = vmatpush.bf16.msra.mxu0 0
        %536 = vmatpush.bf16.msra.mxu0 0
        %537 = vmatpush.bf16.msra.mxu0 0
        %538 = vmatpush.bf16.msra.mxu0 %v460
        %539 = vmatmul.bf16.gmra.mxu0 %v448
        %v540 = vpop.f32.mrf.mxu0
        %v541 = vadd.f32 %v407, %v540
        %v542 = vpop.f32.mrf.mxu0
        %543 = vdwg.mxu0
        %544 = vmatpush.bf16.msra.mxu0 0
        %545 = vmatpush.bf16.msra.mxu0 0
        %546 = vmatpush.bf16.msra.mxu0 0
        %547 = vmatpush.bf16.msra.mxu0 0
        %548 = vmatpush.bf16.msra.mxu0 0
        %549 = vmatpush.bf16.msra.mxu0 0
        %550 = vmatpush.bf16.msra.mxu0 0
        %551 = vmatpush.bf16.msra.mxu0 %v462
        %552 = vmatmul.bf16.gmra.mxu0 %v448
        %v553 = vpop.f32.mrf.mxu0
        %v554 = vadd.f32 %v420, %v553
        %v555 = vpop.f32.mrf.mxu0
        %556 = vdwg.mxu0
        %557 = vmatpush.bf16.msra.mxu0 0
        %558 = vmatpush.bf16.msra.mxu0 0
        %559 = vmatpush.bf16.msra.mxu0 0
        %560 = vmatpush.bf16.msra.mxu0 0
        %561 = vmatpush.bf16.msra.mxu0 0
        %562 = vmatpush.bf16.msra.mxu0 0
        %563 = vmatpush.bf16.msra.mxu0 0
        %564 = vmatpush.bf16.msra.mxu0 %v464
        %565 = vmatmul.bf16.gmra.mxu0 %v448
        %v566 = vpop.f32.mrf.mxu0
        %v567 = vadd.f32 %v433, %v566
        %v568 = vpop.f32.mrf.mxu0
        %569 = vdwg.mxu0
        %v570 = vld [vmem:[%s235] sm:$0xff]
        %v571 = vld [vmem:[%s235 + $0x8] sm:$0xff]
        %v572 = vld [vmem:[%s235 + $0x10] sm:$0x3]
        %s573 = scalar_lea.vmem %s239, 24
        %v574 = vld [vmem:[%s573] sm:$0xf]
        %576 = vst [vmem:[#allocation1] ss:$4 sm:$0xff] %v570
        %s578 = scalar_lea.vmem [#allocation1], 32
        %579 = vst [vmem:[%s578] ss:$4 sm:$0xff] %v571
        %v580 = vld.sshfl [vmem:[#allocation1] sm:$0xff pattern:$0x73625140]
        %v582 = vld.sshfl [vmem:[#allocation1 + $0x8] sm:$0xff pattern:$0x73625140]
        %v584 = vld.sshfl [vmem:[#allocation1 + $0x10] sm:$0xff pattern:$0x73625140]
        %v586 = vld.sshfl [vmem:[#allocation1 + $0x18] sm:$0xff pattern:$0x73625140]
        %v588 = vld.sshfl [vmem:[#allocation1 + $0x20] sm:$0xff pattern:$0x73625140]
        %v590 = vld.sshfl [vmem:[#allocation1 + $0x28] sm:$0xff pattern:$0x73625140]
        %v592 = vld.sshfl [vmem:[#allocation1 + $0x30] sm:$0xff pattern:$0x73625140]
        %v594 = vld.sshfl [vmem:[#allocation1 + $0x38] sm:$0xff pattern:$0x73625140]
        %597 = vst [vmem:[#allocation1] ss:$4 sm:$0xff] %v572
        %v598 = vld.sshfl [vmem:[#allocation1] sm:$0xff pattern:$0x73625140]
        %600 = vrot.lane.b32.xlu0 %v580, 64
        %v601 = vpop.permute.xlu0 %600
        %602 = vrot.lane.b32.xlu0 %v582, 64
        %v603 = vpop.permute.xlu0 %602
        %604 = vrot.lane.b32.xlu0 %v584, 64
        %v605 = vpop.permute.xlu0 %604
        %606 = vrot.lane.b32.xlu0 %v586, 64
        %v607 = vpop.permute.xlu0 %606
        %608 = vrot.lane.b32.xlu0 %v588, 64
        %v609 = vpop.permute.xlu0 %608
        %610 = vrot.lane.b32.xlu0 %v590, 64
        %v611 = vpop.permute.xlu0 %610
        %612 = vrot.lane.b32.xlu0 %v592, 64
        %v613 = vpop.permute.xlu0 %612
        %614 = vrot.lane.b32.xlu0 %v594, 64
        %v615 = vpop.permute.xlu0 %614
        %616 = vrot.lane.b32.xlu0 %v598, 64
        %v617 = vpop.permute.xlu0 %616
        %vm618 = vcmask 523264
        %v619 = vsel %vm618, %v601, %v603
        %v620 = vsel %vm618, %v603, %v605
        %v621 = vsel %vm618, %v605, %v607
        %v622 = vsel %vm618, %v607, %v609
        %v623 = vsel %vm618, %v609, %v611
        %v624 = vsel %vm618, %v611, %v613
        %v625 = vsel %vm618, %v613, %v615
        %v626 = vsel %vm618, %v615, %v617
        %v628 = vsel %vm303, %v574, 0
        %v631 = vsel %vm307, %v619, 0
        %v634 = vsel %vm307, %v620, 0
        %v637 = vsel %vm307, %v621, 0
        %v640 = vsel %vm307, %v622, 0
        %v643 = vsel %vm307, %v623, 0
        %v646 = vsel %vm307, %v624, 0
        %v649 = vsel %vm307, %v625, 0
        %v652 = vsel %vm307, %v626, 0
        %654 = vmatpush.bf16.msra.mxu0 0
        %655 = vmatpush.bf16.msra.mxu0 0
        %656 = vmatpush.bf16.msra.mxu0 0
        %657 = vmatpush.bf16.msra.mxu0 0
        %658 = vmatpush.bf16.msra.mxu0 0
        %659 = vmatpush.bf16.msra.mxu0 0
        %660 = vmatpush.bf16.msra.mxu0 0
        %661 = vmatpush.bf16.msra.mxu0 %v631
        %662 = vmatmul.bf16.gmra.mxu0 %v628
        %v663 = vpop.f32.mrf.mxu0
        %v664 = vadd.f32 0.0, %v663
        %v665 = vpop.f32.mrf.mxu0
        %666 = vdwg.mxu0
        %667 = vmatpush.bf16.msra.mxu0 0
        %668 = vmatpush.bf16.msra.mxu0 0
        %669 = vmatpush.bf16.msra.mxu0 0
        %670 = vmatpush.bf16.msra.mxu0 0
        %671 = vmatpush.bf16.msra.mxu0 0
        %672 = vmatpush.bf16.msra.mxu0 0
        %673 = vmatpush.bf16.msra.mxu0 0
        %674 = vmatpush.bf16.msra.mxu0 %v634
        %675 = vmatmul.bf16.gmra.mxu0 %v628
        %v676 = vpop.f32.mrf.mxu0
        %v677 = vadd.f32 0.0, %v676
        %v678 = vpop.f32.mrf.mxu0
        %679 = vdwg.mxu0
        %680 = vmatpush.bf16.msra.mxu0 0
        %681 = vmatpush.bf16.msra.mxu0 0
        %682 = vmatpush.bf16.msra.mxu0 0
        %683 = vmatpush.bf16.msra.mxu0 0
        %684 = vmatpush.bf16.msra.mxu0 0
        %685 = vmatpush.bf16.msra.mxu0 0
        %686 = vmatpush.bf16.msra.mxu0 0
        %687 = vmatpush.bf16.msra.mxu0 %v637
        %688 = vmatmul.bf16.gmra.mxu0 %v628
        %v689 = vpop.f32.mrf.mxu0
        %v690 = vadd.f32 0.0, %v689
        %v691 = vpop.f32.mrf.mxu0
        %692 = vdwg.mxu0
        %693 = vmatpush.bf16.msra.mxu0 0
        %694 = vmatpush.bf16.msra.mxu0 0
        %695 = vmatpush.bf16.msra.mxu0 0
        %696 = vmatpush.bf16.msra.mxu0 0
        %697 = vmatpush.bf16.msra.mxu0 0
        %698 = vmatpush.bf16.msra.mxu0 0
        %699 = vmatpush.bf16.msra.mxu0 0
        %700 = vmatpush.bf16.msra.mxu0 %v640
        %701 = vmatmul.bf16.gmra.mxu0 %v628
        %v702 = vpop.f32.mrf.mxu0
        %v703 = vadd.f32 0.0, %v702
        %v704 = vpop.f32.mrf.mxu0
        %705 = vdwg.mxu0
        %706 = vmatpush.bf16.msra.mxu0 0
        %707 = vmatpush.bf16.msra.mxu0 0
        %708 = vmatpush.bf16.msra.mxu0 0
        %709 = vmatpush.bf16.msra.mxu0 0
        %710 = vmatpush.bf16.msra.mxu0 0
        %711 = vmatpush.bf16.msra.mxu0 0
        %712 = vmatpush.bf16.msra.mxu0 0
        %713 = vmatpush.bf16.msra.mxu0 %v643
        %714 = vmatmul.bf16.gmra.mxu0 %v628
        %v715 = vpop.f32.mrf.mxu0
        %v716 = vadd.f32 0.0, %v715
        %v717 = vpop.f32.mrf.mxu0
        %718 = vdwg.mxu0
        %719 = vmatpush.bf16.msra.mxu0 0
        %720 = vmatpush.bf16.msra.mxu0 0
        %721 = vmatpush.bf16.msra.mxu0 0
        %722 = vmatpush.bf16.msra.mxu0 0
        %723 = vmatpush.bf16.msra.mxu0 0
        %724 = vmatpush.bf16.msra.mxu0 0
        %725 = vmatpush.bf16.msra.mxu0 0
        %726 = vmatpush.bf16.msra.mxu0 %v646
        %727 = vmatmul.bf16.gmra.mxu0 %v628
        %v728 = vpop.f32.mrf.mxu0
        %v729 = vadd.f32 0.0, %v728
        %v730 = vpop.f32.mrf.mxu0
        %731 = vdwg.mxu0
        %732 = vmatpush.bf16.msra.mxu0 0
        %733 = vmatpush.bf16.msra.mxu0 0
        %734 = vmatpush.bf16.msra.mxu0 0
        %735 = vmatpush.bf16.msra.mxu0 0
        %736 = vmatpush.bf16.msra.mxu0 0
        %737 = vmatpush.bf16.msra.mxu0 0
        %738 = vmatpush.bf16.msra.mxu0 0
        %739 = vmatpush.bf16.msra.mxu0 %v649
        %740 = vmatmul.bf16.gmra.mxu0 %v628
        %v741 = vpop.f32.mrf.mxu0
        %v742 = vadd.f32 0.0, %v741
        %v743 = vpop.f32.mrf.mxu0
        %744 = vdwg.mxu0
        %745 = vmatpush.bf16.msra.mxu0 0
        %746 = vmatpush.bf16.msra.mxu0 0
        %747 = vmatpush.bf16.msra.mxu0 0
        %748 = vmatpush.bf16.msra.mxu0 0
        %749 = vmatpush.bf16.msra.mxu0 0
        %750 = vmatpush.bf16.msra.mxu0 0
        %751 = vmatpush.bf16.msra.mxu0 0
        %752 = vmatpush.bf16.msra.mxu0 %v652
        %753 = vmatmul.bf16.gmra.mxu0 %v628
        %v754 = vpop.f32.mrf.mxu0
        %v755 = vadd.f32 0.0, %v754
        %v756 = vpop.f32.mrf.mxu0
        %757 = vdwg.mxu0
        %v758 = vadd.f32 %v476, %v664
        %v759 = vadd.f32 %v489, %v677
        %v760 = vadd.f32 %v502, %v690
        %v761 = vadd.f32 %v515, %v703
        %v762 = vadd.f32 %v528, %v716
        %v763 = vadd.f32 %v541, %v729
        %v764 = vadd.f32 %v554, %v742
        %v765 = vadd.f32 %v567, %v755
        %v766 = vld [vmem:[%s235] sm:$0xff]
        %v767 = vld [vmem:[%s235 + $0x8] sm:$0xff]
        %v768 = vld [vmem:[%s235 + $0x10] sm:$0x3]
        %s769 = scalar_lea.vmem %s239, 4
        %v770 = vld [vmem:[%s769] sm:$0xf]
        %s771 = scalar_lea.vmem %s239, 16
        %v772 = vld [vmem:[%s771] sm:$0xf]
        %774 = vst [vmem:[#allocation1] ss:$4 sm:$0xff] %v766
        %s776 = scalar_lea.vmem [#allocation1], 32
        %777 = vst [vmem:[%s776] ss:$4 sm:$0xff] %v767
        %v778 = vld.sshfl [vmem:[#allocation1] sm:$0xff pattern:$0x73625140]
        %v780 = vld.sshfl [vmem:[#allocation1 + $0x8] sm:$0xff pattern:$0x73625140]
        %v782 = vld.sshfl [vmem:[#allocation1 + $0x10] sm:$0xff pattern:$0x73625140]
        %v784 = vld.sshfl [vmem:[#allocation1 + $0x18] sm:$0xff pattern:$0x73625140]
        %v786 = vld.sshfl [vmem:[#allocation1 + $0x20] sm:$0xff pattern:$0x73625140]
        %v788 = vld.sshfl [vmem:[#allocation1 + $0x28] sm:$0xff pattern:$0x73625140]
        %v790 = vld.sshfl [vmem:[#allocation1 + $0x30] sm:$0xff pattern:$0x73625140]
        %v792 = vld.sshfl [vmem:[#allocation1 + $0x38] sm:$0xff pattern:$0x73625140]
        %795 = vst [vmem:[#allocation1] ss:$4 sm:$0xff] %v768
        %v796 = vld.sshfl [vmem:[#allocation1] sm:$0xff pattern:$0x73625140]
        %798 = vrot.lane.b32.xlu0 %v778, 95
        %v799 = vpop.permute.xlu0 %798
        %800 = vrot.lane.b32.xlu0 %v780, 95
        %v801 = vpop.permute.xlu0 %800
        %802 = vrot.lane.b32.xlu0 %v782, 95
        %v803 = vpop.permute.xlu0 %802
        %804 = vrot.lane.b32.xlu0 %v784, 95
        %v805 = vpop.permute.xlu0 %804
        %806 = vrot.lane.b32.xlu0 %v786, 95
        %v807 = vpop.permute.xlu0 %806
        %808 = vrot.lane.b32.xlu0 %v788, 95
        %v809 = vpop.permute.xlu0 %808
        %810 = vrot.lane.b32.xlu0 %v790, 95
        %v811 = vpop.permute.xlu0 %810
        %812 = vrot.lane.b32.xlu0 %v792, 95
        %v813 = vpop.permute.xlu0 %812
        %814 = vrot.lane.b32.xlu0 %v796, 95
        %v815 = vpop.permute.xlu0 %814
        %vm816 = vcmask 777216
        %v817 = vsel %vm816, %v799, %v801
        %v818 = vsel %vm816, %v801, %v803
        %v819 = vsel %vm816, %v803, %v805
        %v820 = vsel %vm816, %v805, %v807
        %v821 = vsel %vm816, %v807, %v809
        %v822 = vsel %vm816, %v809, %v811
        %v823 = vsel %vm816, %v811, %v813
        %v824 = vsel %vm816, %v813, %v815
        %v826 = vsel %vm303, %v772, 0
        %v829 = vsel %vm307, %v817, 0
        %v832 = vsel %vm307, %v818, 0
        %v835 = vsel %vm307, %v819, 0
        %v838 = vsel %vm307, %v820, 0
        %v841 = vsel %vm307, %v821, 0
        %v844 = vsel %vm307, %v822, 0
        %v847 = vsel %vm307, %v823, 0
        %v850 = vsel %vm307, %v824, 0
        %852 = vmatpush.bf16.msra.mxu0 0
        %853 = vmatpush.bf16.msra.mxu0 0
        %854 = vmatpush.bf16.msra.mxu0 0
        %855 = vmatpush.bf16.msra.mxu0 0
        %856 = vmatpush.bf16.msra.mxu0 0
        %857 = vmatpush.bf16.msra.mxu0 0
        %858 = vmatpush.bf16.msra.mxu0 0
        %859 = vmatpush.bf16.msra.mxu0 %v829
        %860 = vmatmul.bf16.gmra.mxu0 %v826
        %v861 = vpop.f32.mrf.mxu0
        %v862 = vadd.f32 0.0, %v861
        %v863 = vpop.f32.mrf.mxu0
        %864 = vdwg.mxu0
        %865 = vmatpush.bf16.msra.mxu0 0
        %866 = vmatpush.bf16.msra.mxu0 0
        %867 = vmatpush.bf16.msra.mxu0 0
        %868 = vmatpush.bf16.msra.mxu0 0
        %869 = vmatpush.bf16.msra.mxu0 0
        %870 = vmatpush.bf16.msra.mxu0 0
        %871 = vmatpush.bf16.msra.mxu0 0
        %872 = vmatpush.bf16.msra.mxu0 %v832
        %873 = vmatmul.bf16.gmra.mxu0 %v826
        %v874 = vpop.f32.mrf.mxu0
        %v875 = vadd.f32 0.0, %v874
        %v876 = vpop.f32.mrf.mxu0
        %877 = vdwg.mxu0
        %878 = vmatpush.bf16.msra.mxu0 0
        %879 = vmatpush.bf16.msra.mxu0 0
        %880 = vmatpush.bf16.msra.mxu0 0
        %881 = vmatpush.bf16.msra.mxu0 0
        %882 = vmatpush.bf16.msra.mxu0 0
        %883 = vmatpush.bf16.msra.mxu0 0
        %884 = vmatpush.bf16.msra.mxu0 0
        %885 = vmatpush.bf16.msra.mxu0 %v835
        %886 = vmatmul.bf16.gmra.mxu0 %v826
        %v887 = vpop.f32.mrf.mxu0
        %v888 = vadd.f32 0.0, %v887
        %v889 = vpop.f32.mrf.mxu0
        %890 = vdwg.mxu0
        %891 = vmatpush.bf16.msra.mxu0 0
        %892 = vmatpush.bf16.msra.mxu0 0
        %893 = vmatpush.bf16.msra.mxu0 0
        %894 = vmatpush.bf16.msra.mxu0 0
        %895 = vmatpush.bf16.msra.mxu0 0
        %896 = vmatpush.bf16.msra.mxu0 0
        %897 = vmatpush.bf16.msra.mxu0 0
        %898 = vmatpush.bf16.msra.mxu0 %v838
        %899 = vmatmul.bf16.gmra.mxu0 %v826
        %v900 = vpop.f32.mrf.mxu0
        %v901 = vadd.f32 0.0, %v900
        %v902 = vpop.f32.mrf.mxu0
        %903 = vdwg.mxu0
        %904 = vmatpush.bf16.msra.mxu0 0
        %905 = vmatpush.bf16.msra.mxu0 0
        %906 = vmatpush.bf16.msra.mxu0 0
        %907 = vmatpush.bf16.msra.mxu0 0
        %908 = vmatpush.bf16.msra.mxu0 0
        %909 = vmatpush.bf16.msra.mxu0 0
        %910 = vmatpush.bf16.msra.mxu0 0
        %911 = vmatpush.bf16.msra.mxu0 %v841
        %912 = vmatmul.bf16.gmra.mxu0 %v826
        %v913 = vpop.f32.mrf.mxu0
        %v914 = vadd.f32 0.0, %v913
        %v915 = vpop.f32.mrf.mxu0
        %916 = vdwg.mxu0
        %917 = vmatpush.bf16.msra.mxu0 0
        %918 = vmatpush.bf16.msra.mxu0 0
        %919 = vmatpush.bf16.msra.mxu0 0
        %920 = vmatpush.bf16.msra.mxu0 0
        %921 = vmatpush.bf16.msra.mxu0 0
        %922 = vmatpush.bf16.msra.mxu0 0
        %923 = vmatpush.bf16.msra.mxu0 0
        %924 = vmatpush.bf16.msra.mxu0 %v844
        %925 = vmatmul.bf16.gmra.mxu0 %v826
        %v926 = vpop.f32.mrf.mxu0
        %v927 = vadd.f32 0.0, %v926
        %v928 = vpop.f32.mrf.mxu0
        %929 = vdwg.mxu0
        %930 = vmatpush.bf16.msra.mxu0 0
        %931 = vmatpush.bf16.msra.mxu0 0
        %932 = vmatpush.bf16.msra.mxu0 0
        %933 = vmatpush.bf16.msra.mxu0 0
        %934 = vmatpush.bf16.msra.mxu0 0
        %935 = vmatpush.bf16.msra.mxu0 0
        %936 = vmatpush.bf16.msra.mxu0 0
        %937 = vmatpush.bf16.msra.mxu0 %v847
        %938 = vmatmul.bf16.gmra.mxu0 %v826
        %v939 = vpop.f32.mrf.mxu0
        %v940 = vadd.f32 0.0, %v939
        %v941 = vpop.f32.mrf.mxu0
        %942 = vdwg.mxu0
        %943 = vmatpush.bf16.msra.mxu0 0
        %944 = vmatpush.bf16.msra.mxu0 0
        %945 = vmatpush.bf16.msra.mxu0 0
        %946 = vmatpush.bf16.msra.mxu0 0
        %947 = vmatpush.bf16.msra.mxu0 0
        %948 = vmatpush.bf16.msra.mxu0 0
        %949 = vmatpush.bf16.msra.mxu0 0
        %950 = vmatpush.bf16.msra.mxu0 %v850
        %951 = vmatmul.bf16.gmra.mxu0 %v826
        %v952 = vpop.f32.mrf.mxu0
        %v953 = vadd.f32 0.0, %v952
        %v954 = vpop.f32.mrf.mxu0
        %955 = vdwg.mxu0
        %956 = vst [vmem:[#allocation1] ss:$4 sm:$0xff] %v766
        %s957 = scalar_lea.vmem [#allocation1], 32
        %958 = vst [vmem:[%s957] ss:$4 sm:$0xff] %v767
        %v959 = vld.sshfl [vmem:[#allocation1] sm:$0xff pattern:$0x73625140]
        %v961 = vld.sshfl [vmem:[#allocation1 + $0x8] sm:$0xff pattern:$0x73625140]
        %v963 = vld.sshfl [vmem:[#allocation1 + $0x10] sm:$0xff pattern:$0x73625140]
        %v965 = vld.sshfl [vmem:[#allocation1 + $0x18] sm:$0xff pattern:$0x73625140]
        %v967 = vld.sshfl [vmem:[#allocation1 + $0x20] sm:$0xff pattern:$0x73625140]
        %v969 = vld.sshfl [vmem:[#allocation1 + $0x28] sm:$0xff pattern:$0x73625140]
        %v971 = vld.sshfl [vmem:[#allocation1 + $0x30] sm:$0xff pattern:$0x73625140]
        %v973 = vld.sshfl [vmem:[#allocation1 + $0x38] sm:$0xff pattern:$0x73625140]
        %975 = vst [vmem:[#allocation1] ss:$4 sm:$0xff] %v768
        %v976 = vld.sshfl [vmem:[#allocation1] sm:$0xff pattern:$0x73625140]
        %978 = vrot.lane.b32.xlu0 %v959, 127
        %v979 = vpop.permute.xlu0 %978
        %980 = vrot.lane.b32.xlu0 %v961, 127
        %v981 = vpop.permute.xlu0 %980
        %982 = vrot.lane.b32.xlu0 %v963, 127
        %v983 = vpop.permute.xlu0 %982
        %984 = vrot.lane.b32.xlu0 %v965, 127
        %v985 = vpop.permute.xlu0 %984
        %986 = vrot.lane.b32.xlu0 %v967, 127
        %v987 = vpop.permute.xlu0 %986
        %988 = vrot.lane.b32.xlu0 %v969, 127
        %v989 = vpop.permute.xlu0 %988
        %990 = vrot.lane.b32.xlu0 %v971, 127
        %v991 = vpop.permute.xlu0 %990
        %992 = vrot.lane.b32.xlu0 %v973, 127
        %v993 = vpop.permute.xlu0 %992
        %994 = vrot.lane.b32.xlu0 %v976, 127
        %v995 = vpop.permute.xlu0 %994
        %vm996 = vcmask 1039360
        %v997 = vsel %vm996, %v979, %v981
        %v998 = vsel %vm996, %v981, %v983
        %v999 = vsel %vm996, %v983, %v985
        %v1000 = vsel %vm996, %v985, %v987
        %v1001 = vsel %vm996, %v987, %v989
        %v1002 = vsel %vm996, %v989, %v991
        %v1003 = vsel %vm996, %v991, %v993
        %v1004 = vsel %vm996, %v993, %v995
        %v1006 = vsel %vm303, %v770, 0
        %v1009 = vsel %vm307, %v997, 0
        %v1012 = vsel %vm307, %v998, 0
        %v1015 = vsel %vm307, %v999, 0
        %v1018 = vsel %vm307, %v1000, 0
        %v1021 = vsel %vm307, %v1001, 0
        %v1024 = vsel %vm307, %v1002, 0
        %v1027 = vsel %vm307, %v1003, 0
        %v1030 = vsel %vm307, %v1004, 0
        %1032 = vmatpush.bf16.msra.mxu0 0
        %1033 = vmatpush.bf16.msra.mxu0 0
        %1034 = vmatpush.bf16.msra.mxu0 0
        %1035 = vmatpush.bf16.msra.mxu0 0
        %1036 = vmatpush.bf16.msra.mxu0 0
        %1037 = vmatpush.bf16.msra.mxu0 0
        %1038 = vmatpush.bf16.msra.mxu0 0
        %1039 = vmatpush.bf16.msra.mxu0 %v1009
        %1040 = vmatmul.bf16.gmra.mxu0 %v1006
        %v1041 = vpop.f32.mrf.mxu0
        %v1042 = vadd.f32 %v862, %v1041
        %v1043 = vpop.f32.mrf.mxu0
        %1044 = vdwg.mxu0
        %1045 = vmatpush.bf16.msra.mxu0 0
        %1046 = vmatpush.bf16.msra.mxu0 0
        %1047 = vmatpush.bf16.msra.mxu0 0
        %1048 = vmatpush.bf16.msra.mxu0 0
        %1049 = vmatpush.bf16.msra.mxu0 0
        %1050 = vmatpush.bf16.msra.mxu0 0
        %1051 = vmatpush.bf16.msra.mxu0 0
        %1052 = vmatpush.bf16.msra.mxu0 %v1012
        %1053 = vmatmul.bf16.gmra.mxu0 %v1006
        %v1054 = vpop.f32.mrf.mxu0
        %v1055 = vadd.f32 %v875, %v1054
        %v1056 = vpop.f32.mrf.mxu0
        %1057 = vdwg.mxu0
        %1058 = vmatpush.bf16.msra.mxu0 0
        %1059 = vmatpush.bf16.msra.mxu0 0
        %1060 = vmatpush.bf16.msra.mxu0 0
        %1061 = vmatpush.bf16.msra.mxu0 0
        %1062 = vmatpush.bf16.msra.mxu0 0
        %1063 = vmatpush.bf16.msra.mxu0 0
        %1064 = vmatpush.bf16.msra.mxu0 0
        %1065 = vmatpush.bf16.msra.mxu0 %v1015
        %1066 = vmatmul.bf16.gmra.mxu0 %v1006
        %v1067 = vpop.f32.mrf.mxu0
        %v1068 = vadd.f32 %v888, %v1067
        %v1069 = vpop.f32.mrf.mxu0
        %1070 = vdwg.mxu0
        %1071 = vmatpush.bf16.msra.mxu0 0
        %1072 = vmatpush.bf16.msra.mxu0 0
        %1073 = vmatpush.bf16.msra.mxu0 0
        %1074 = vmatpush.bf16.msra.mxu0 0
        %1075 = vmatpush.bf16.msra.mxu0 0
        %1076 = vmatpush.bf16.msra.mxu0 0
        %1077 = vmatpush.bf16.msra.mxu0 0
        %1078 = vmatpush.bf16.msra.mxu0 %v1018
        %1079 = vmatmul.bf16.gmra.mxu0 %v1006
        %v1080 = vpop.f32.mrf.mxu0
        %v1081 = vadd.f32 %v901, %v1080
        %v1082 = vpop.f32.mrf.mxu0
        %1083 = vdwg.mxu0
        %1084 = vmatpush.bf16.msra.mxu0 0
        %1085 = vmatpush.bf16.msra.mxu0 0
        %1086 = vmatpush.bf16.msra.mxu0 0
        %1087 = vmatpush.bf16.msra.mxu0 0
        %1088 = vmatpush.bf16.msra.mxu0 0
        %1089 = vmatpush.bf16.msra.mxu0 0
        %1090 = vmatpush.bf16.msra.mxu0 0
        %1091 = vmatpush.bf16.msra.mxu0 %v1021
        %1092 = vmatmul.bf16.gmra.mxu0 %v1006
        %v1093 = vpop.f32.mrf.mxu0
        %v1094 = vadd.f32 %v914, %v1093
        %v1095 = vpop.f32.mrf.mxu0
        %1096 = vdwg.mxu0
        %1097 = vmatpush.bf16.msra.mxu0 0
        %1098 = vmatpush.bf16.msra.mxu0 0
        %1099 = vmatpush.bf16.msra.mxu0 0
        %1100 = vmatpush.bf16.msra.mxu0 0
        %1101 = vmatpush.bf16.msra.mxu0 0
        %1102 = vmatpush.bf16.msra.mxu0 0
        %1103 = vmatpush.bf16.msra.mxu0 0
        %1104 = vmatpush.bf16.msra.mxu0 %v1024
        %1105 = vmatmul.bf16.gmra.mxu0 %v1006
        %v1106 = vpop.f32.mrf.mxu0
        %v1107 = vadd.f32 %v927, %v1106
        %v1108 = vpop.f32.mrf.mxu0
        %1109 = vdwg.mxu0
        %1110 = vmatpush.bf16.msra.mxu0 0
        %1111 = vmatpush.bf16.msra.mxu0 0
        %1112 = vmatpush.bf16.msra.mxu0 0
        %1113 = vmatpush.bf16.msra.mxu0 0
        %1114 = vmatpush.bf16.msra.mxu0 0
        %1115 = vmatpush.bf16.msra.mxu0 0
        %1116 = vmatpush.bf16.msra.mxu0 0
        %1117 = vmatpush.bf16.msra.mxu0 %v1027
        %1118 = vmatmul.bf16.gmra.mxu0 %v1006
        %v1119 = vpop.f32.mrf.mxu0
        %v1120 = vadd.f32 %v940, %v1119
        %v1121 = vpop.f32.mrf.mxu0
        %1122 = vdwg.mxu0
        %1123 = vmatpush.bf16.msra.mxu0 0
        %1124 = vmatpush.bf16.msra.mxu0 0
        %1125 = vmatpush.bf16.msra.mxu0 0
        %1126 = vmatpush.bf16.msra.mxu0 0
        %1127 = vmatpush.bf16.msra.mxu0 0
        %1128 = vmatpush.bf16.msra.mxu0 0
        %1129 = vmatpush.bf16.msra.mxu0 0
        %1130 = vmatpush.bf16.msra.mxu0 %v1030
        %1131 = vmatmul.bf16.gmra.mxu0 %v1006
        %v1132 = vpop.f32.mrf.mxu0
        %v1133 = vadd.f32 %v953, %v1132
        %v1134 = vpop.f32.mrf.mxu0
        %1135 = vdwg.mxu0
        %v1136 = vld [vmem:[%s235] sm:$0xff]
        %v1137 = vld [vmem:[%s235 + $0x8] sm:$0xff]
        %v1138 = vld [vmem:[%s235 + $0x10] sm:$0x3]
        %s1139 = scalar_lea.vmem %s239, 28
        %v1140 = vld [vmem:[%s1139] sm:$0xf]
        %1142 = vst [vmem:[#allocation1] ss:$4 sm:$0xff] %v1136
        %s1144 = scalar_lea.vmem [#allocation1], 32
        %1145 = vst [vmem:[%s1144] ss:$4 sm:$0xff] %v1137
        %v1146 = vld.sshfl [vmem:[#allocation1] sm:$0xff pattern:$0x73625140]
        %v1148 = vld.sshfl [vmem:[#allocation1 + $0x8] sm:$0xff pattern:$0x73625140]
        %v1150 = vld.sshfl [vmem:[#allocation1 + $0x10] sm:$0xff pattern:$0x73625140]
        %v1152 = vld.sshfl [vmem:[#allocation1 + $0x18] sm:$0xff pattern:$0x73625140]
        %v1154 = vld.sshfl [vmem:[#allocation1 + $0x20] sm:$0xff pattern:$0x73625140]
        %v1156 = vld.sshfl [vmem:[#allocation1 + $0x28] sm:$0xff pattern:$0x73625140]
        %v1158 = vld.sshfl [vmem:[#allocation1 + $0x30] sm:$0xff pattern:$0x73625140]
        %v1160 = vld.sshfl [vmem:[#allocation1 + $0x38] sm:$0xff pattern:$0x73625140]
        %1163 = vst [vmem:[#allocation1] ss:$4 sm:$0xff] %v1138
        %v1164 = vld.sshfl [vmem:[#allocation1] sm:$0xff pattern:$0x73625140]
        %1166 = vrot.lane.b32.xlu0 %v1146, 63
        %v1167 = vpop.permute.xlu0 %1166
        %1168 = vrot.lane.b32.xlu0 %v1148, 63
        %v1169 = vpop.permute.xlu0 %1168
        %1170 = vrot.lane.b32.xlu0 %v1150, 63
        %v1171 = vpop.permute.xlu0 %1170
        %1172 = vrot.lane.b32.xlu0 %v1152, 63
        %v1173 = vpop.permute.xlu0 %1172
        %1174 = vrot.lane.b32.xlu0 %v1154, 63
        %v1175 = vpop.permute.xlu0 %1174
        %1176 = vrot.lane.b32.xlu0 %v1156, 63
        %v1177 = vpop.permute.xlu0 %1176
        %1178 = vrot.lane.b32.xlu0 %v1158, 63
        %v1179 = vpop.permute.xlu0 %1178
        %1180 = vrot.lane.b32.xlu0 %v1160, 63
        %v1181 = vpop.permute.xlu0 %1180
        %1182 = vrot.lane.b32.xlu0 %v1164, 63
        %v1183 = vpop.permute.xlu0 %1182
        %vm1184 = vcmask 515072
        %v1185 = vsel %vm1184, %v1167, %v1169
        %v1186 = vsel %vm1184, %v1169, %v1171
        %v1187 = vsel %vm1184, %v1171, %v1173
        %v1188 = vsel %vm1184, %v1173, %v1175
        %v1189 = vsel %vm1184, %v1175, %v1177
        %v1190 = vsel %vm1184, %v1177, %v1179
        %v1191 = vsel %vm1184, %v1179, %v1181
        %v1192 = vsel %vm1184, %v1181, %v1183
        %v1194 = vsel %vm303, %v1140, 0
        %v1197 = vsel %vm307, %v1185, 0
        %v1200 = vsel %vm307, %v1186, 0
        %v1203 = vsel %vm307, %v1187, 0
        %v1206 = vsel %vm307, %v1188, 0
        %v1209 = vsel %vm307, %v1189, 0
        %v1212 = vsel %vm307, %v1190, 0
        %v1215 = vsel %vm307, %v1191, 0
        %v1218 = vsel %vm307, %v1192, 0
        %1220 = vmatpush.bf16.msra.mxu0 0
        %1221 = vmatpush.bf16.msra.mxu0 0
        %1222 = vmatpush.bf16.msra.mxu0 0
        %1223 = vmatpush.bf16.msra.mxu0 0
        %1224 = vmatpush.bf16.msra.mxu0 0
        %1225 = vmatpush.bf16.msra.mxu0 0
        %1226 = vmatpush.bf16.msra.mxu0 0
        %1227 = vmatpush.bf16.msra.mxu0 %v1197
        %1228 = vmatmul.bf16.gmra.mxu0 %v1194
        %v1229 = vpop.f32.mrf.mxu0
        %v1230 = vadd.f32 0.0, %v1229
        %v1231 = vpop.f32.mrf.mxu0
        %1232 = vdwg.mxu0
        %1233 = vmatpush.bf16.msra.mxu0 0
        %1234 = vmatpush.bf16.msra.mxu0 0
        %1235 = vmatpush.bf16.msra.mxu0 0
        %1236 = vmatpush.bf16.msra.mxu0 0
        %1237 = vmatpush.bf16.msra.mxu0 0
        %1238 = vmatpush.bf16.msra.mxu0 0
        %1239 = vmatpush.bf16.msra.mxu0 0
        %1240 = vmatpush.bf16.msra.mxu0 %v1200
        %1241 = vmatmul.bf16.gmra.mxu0 %v1194
        %v1242 = vpop.f32.mrf.mxu0
        %v1243 = vadd.f32 0.0, %v1242
        %v1244 = vpop.f32.mrf.mxu0
        %1245 = vdwg.mxu0
        %1246 = vmatpush.bf16.msra.mxu0 0
        %1247 = vmatpush.bf16.msra.mxu0 0
        %1248 = vmatpush.bf16.msra.mxu0 0
        %1249 = vmatpush.bf16.msra.mxu0 0
        %1250 = vmatpush.bf16.msra.mxu0 0
        %1251 = vmatpush.bf16.msra.mxu0 0
        %1252 = vmatpush.bf16.msra.mxu0 0
        %1253 = vmatpush.bf16.msra.mxu0 %v1203
        %1254 = vmatmul.bf16.gmra.mxu0 %v1194
        %v1255 = vpop.f32.mrf.mxu0
        %v1256 = vadd.f32 0.0, %v1255
        %v1257 = vpop.f32.mrf.mxu0
        %1258 = vdwg.mxu0
        %1259 = vmatpush.bf16.msra.mxu0 0
        %1260 = vmatpush.bf16.msra.mxu0 0
        %1261 = vmatpush.bf16.msra.mxu0 0
        %1262 = vmatpush.bf16.msra.mxu0 0
        %1263 = vmatpush.bf16.msra.mxu0 0
        %1264 = vmatpush.bf16.msra.mxu0 0
        %1265 = vmatpush.bf16.msra.mxu0 0
        %1266 = vmatpush.bf16.msra.mxu0 %v1206
        %1267 = vmatmul.bf16.gmra.mxu0 %v1194
        %v1268 = vpop.f32.mrf.mxu0
        %v1269 = vadd.f32 0.0, %v1268
        %v1270 = vpop.f32.mrf.mxu0
        %1271 = vdwg.mxu0
        %1272 = vmatpush.bf16.msra.mxu0 0
        %1273 = vmatpush.bf16.msra.mxu0 0
        %1274 = vmatpush.bf16.msra.mxu0 0
        %1275 = vmatpush.bf16.msra.mxu0 0
        %1276 = vmatpush.bf16.msra.mxu0 0
        %1277 = vmatpush.bf16.msra.mxu0 0
        %1278 = vmatpush.bf16.msra.mxu0 0
        %1279 = vmatpush.bf16.msra.mxu0 %v1209
        %1280 = vmatmul.bf16.gmra.mxu0 %v1194
        %v1281 = vpop.f32.mrf.mxu0
        %v1282 = vadd.f32 0.0, %v1281
        %v1283 = vpop.f32.mrf.mxu0
        %1284 = vdwg.mxu0
        %1285 = vmatpush.bf16.msra.mxu0 0
        %1286 = vmatpush.bf16.msra.mxu0 0
        %1287 = vmatpush.bf16.msra.mxu0 0
        %1288 = vmatpush.bf16.msra.mxu0 0
        %1289 = vmatpush.bf16.msra.mxu0 0
        %1290 = vmatpush.bf16.msra.mxu0 0
        %1291 = vmatpush.bf16.msra.mxu0 0
        %1292 = vmatpush.bf16.msra.mxu0 %v1212
        %1293 = vmatmul.bf16.gmra.mxu0 %v1194
        %v1294 = vpop.f32.mrf.mxu0
        %v1295 = vadd.f32 0.0, %v1294
        %v1296 = vpop.f32.mrf.mxu0
        %1297 = vdwg.mxu0
        %1298 = vmatpush.bf16.msra.mxu0 0
        %1299 = vmatpush.bf16.msra.mxu0 0
        %1300 = vmatpush.bf16.msra.mxu0 0
        %1301 = vmatpush.bf16.msra.mxu0 0
        %1302 = vmatpush.bf16.msra.mxu0 0
        %1303 = vmatpush.bf16.msra.mxu0 0
        %1304 = vmatpush.bf16.msra.mxu0 0
        %1305 = vmatpush.bf16.msra.mxu0 %v1215
        %1306 = vmatmul.bf16.gmra.mxu0 %v1194
        %v1307 = vpop.f32.mrf.mxu0
        %v1308 = vadd.f32 0.0, %v1307
        %v1309 = vpop.f32.mrf.mxu0
        %1310 = vdwg.mxu0
        %1311 = vmatpush.bf16.msra.mxu0 0
        %1312 = vmatpush.bf16.msra.mxu0 0
        %1313 = vmatpush.bf16.msra.mxu0 0
        %1314 = vmatpush.bf16.msra.mxu0 0
        %1315 = vmatpush.bf16.msra.mxu0 0
        %1316 = vmatpush.bf16.msra.mxu0 0
        %1317 = vmatpush.bf16.msra.mxu0 0
        %1318 = vmatpush.bf16.msra.mxu0 %v1218
        %1319 = vmatmul.bf16.gmra.mxu0 %v1194
        %v1320 = vpop.f32.mrf.mxu0
        %v1321 = vadd.f32 0.0, %v1320
        %v1322 = vpop.f32.mrf.mxu0
        %1323 = vdwg.mxu0
        %v1324 = vadd.f32 %v1042, %v1230
        %v1325 = vadd.f32 %v1055, %v1243
        %v1326 = vadd.f32 %v1068, %v1256
        %v1327 = vadd.f32 %v1081, %v1269
        %v1328 = vadd.f32 %v1094, %v1282
        %v1329 = vadd.f32 %v1107, %v1295
        %v1330 = vadd.f32 %v1120, %v1308
        %v1331 = vadd.f32 %v1133, %v1321
        %v1332 = vld [vmem:[%s235] sm:$0xff]
        %v1333 = vld [vmem:[%s235 + $0x8] sm:$0xff]
        %v1334 = vld [vmem:[%s235 + $0x10] sm:$0x3]
        %s1335 = scalar_lea.vmem %s239, 8
        %v1336 = vld [vmem:[%s1335] sm:$0xf]
        %s1337 = scalar_lea.vmem %s239, 20
        %v1338 = vld [vmem:[%s1337] sm:$0xf]
        %1340 = vst [vmem:[#allocation1] ss:$4 sm:$0xff] %v1332
        %s1342 = scalar_lea.vmem [#allocation1], 32
        %1343 = vst [vmem:[%s1342] ss:$4 sm:$0xff] %v1333
        %v1344 = vld.sshfl [vmem:[#allocation1] sm:$0xff pattern:$0x73625140]
        %v1346 = vld.sshfl [vmem:[#allocation1 + $0x8] sm:$0xff pattern:$0x73625140]
        %v1348 = vld.sshfl [vmem:[#allocation1 + $0x10] sm:$0xff pattern:$0x73625140]
        %v1350 = vld.sshfl [vmem:[#allocation1 + $0x18] sm:$0xff pattern:$0x73625140]
        %v1352 = vld.sshfl [vmem:[#allocation1 + $0x20] sm:$0xff pattern:$0x73625140]
        %v1354 = vld.sshfl [vmem:[#allocation1 + $0x28] sm:$0xff pattern:$0x73625140]
        %v1356 = vld.sshfl [vmem:[#allocation1 + $0x30] sm:$0xff pattern:$0x73625140]
        %v1358 = vld.sshfl [vmem:[#allocation1 + $0x38] sm:$0xff pattern:$0x73625140]
        %1361 = vst [vmem:[#allocation1] ss:$4 sm:$0xff] %v1334
        %v1362 = vld.sshfl [vmem:[#allocation1] sm:$0xff pattern:$0x73625140]
        %1364 = vrot.lane.b32.xlu0 %v1344, 94
        %v1365 = vpop.permute.xlu0 %1364
        %1366 = vrot.lane.b32.xlu0 %v1346, 94
        %v1367 = vpop.permute.xlu0 %1366
        %1368 = vrot.lane.b32.xlu0 %v1348, 94
        %v1369 = vpop.permute.xlu0 %1368
        %1370 = vrot.lane.b32.xlu0 %v1350, 94
        %v1371 = vpop.permute.xlu0 %1370
        %1372 = vrot.lane.b32.xlu0 %v1352, 94
        %v1373 = vpop.permute.xlu0 %1372
        %1374 = vrot.lane.b32.xlu0 %v1354, 94
        %v1375 = vpop.permute.xlu0 %1374
        %1376 = vrot.lane.b32.xlu0 %v1356, 94
        %v1377 = vpop.permute.xlu0 %1376
        %1378 = vrot.lane.b32.xlu0 %v1358, 94
        %v1379 = vpop.permute.xlu0 %1378
        %1380 = vrot.lane.b32.xlu0 %v1362, 94
        %v1381 = vpop.permute.xlu0 %1380
        %vm1382 = vcmask 769024
        %v1383 = vsel %vm1382, %v1365, %v1367
        %v1384 = vsel %vm1382, %v1367, %v1369
        %v1385 = vsel %vm1382, %v1369, %v1371
        %v1386 = vsel %vm1382, %v1371, %v1373
        %v1387 = vsel %vm1382, %v1373, %v1375
        %v1388 = vsel %vm1382, %v1375, %v1377
        %v1389 = vsel %vm1382, %v1377, %v1379
        %v1390 = vsel %vm1382, %v1379, %v1381
        %v1392 = vsel %vm303, %v1338, 0
        %v1395 = vsel %vm307, %v1383, 0
        %v1398 = vsel %vm307, %v1384, 0
        %v1401 = vsel %vm307, %v1385, 0
        %v1404 = vsel %vm307, %v1386, 0
        %v1407 = vsel %vm307, %v1387, 0
        %v1410 = vsel %vm307, %v1388, 0
        %v1413 = vsel %vm307, %v1389, 0
        %v1416 = vsel %vm307, %v1390, 0
        %1418 = vmatpush.bf16.msra.mxu0 0
        %1419 = vmatpush.bf16.msra.mxu0 0
        %1420 = vmatpush.bf16.msra.mxu0 0
        %1421 = vmatpush.bf16.msra.mxu0 0
        %1422 = vmatpush.bf16.msra.mxu0 0
        %1423 = vmatpush.bf16.msra.mxu0 0
        %1424 = vmatpush.bf16.msra.mxu0 0
        %1425 = vmatpush.bf16.msra.mxu0 %v1395
        %1426 = vmatmul.bf16.gmra.mxu0 %v1392
        %v1427 = vpop.f32.mrf.mxu0
        %v1428 = vadd.f32 0.0, %v1427
        %v1429 = vpop.f32.mrf.mxu0
        %1430 = vdwg.mxu0
        %1431 = vmatpush.bf16.msra.mxu0 0
        %1432 = vmatpush.bf16.msra.mxu0 0
        %1433 = vmatpush.bf16.msra.mxu0 0
        %1434 = vmatpush.bf16.msra.mxu0 0
        %1435 = vmatpush.bf16.msra.mxu0 0
        %1436 = vmatpush.bf16.msra.mxu0 0
        %1437 = vmatpush.bf16.msra.mxu0 0
        %1438 = vmatpush.bf16.msra.mxu0 %v1398
        %1439 = vmatmul.bf16.gmra.mxu0 %v1392
        %v1440 = vpop.f32.mrf.mxu0
        %v1441 = vadd.f32 0.0, %v1440
        %v1442 = vpop.f32.mrf.mxu0
        %1443 = vdwg.mxu0
        %1444 = vmatpush.bf16.msra.mxu0 0
        %1445 = vmatpush.bf16.msra.mxu0 0
        %1446 = vmatpush.bf16.msra.mxu0 0
        %1447 = vmatpush.bf16.msra.mxu0 0
        %1448 = vmatpush.bf16.msra.mxu0 0
        %1449 = vmatpush.bf16.msra.mxu0 0
        %1450 = vmatpush.bf16.msra.mxu0 0
        %1451 = vmatpush.bf16.msra.mxu0 %v1401
        %1452 = vmatmul.bf16.gmra.mxu0 %v1392
        %v1453 = vpop.f32.mrf.mxu0
        %v1454 = vadd.f32 0.0, %v1453
        %v1455 = vpop.f32.mrf.mxu0
        %1456 = vdwg.mxu0
        %1457 = vmatpush.bf16.msra.mxu0 0
        %1458 = vmatpush.bf16.msra.mxu0 0
        %1459 = vmatpush.bf16.msra.mxu0 0
        %1460 = vmatpush.bf16.msra.mxu0 0
        %1461 = vmatpush.bf16.msra.mxu0 0
        %1462 = vmatpush.bf16.msra.mxu0 0
        %1463 = vmatpush.bf16.msra.mxu0 0
        %1464 = vmatpush.bf16.msra.mxu0 %v1404
        %1465 = vmatmul.bf16.gmra.mxu0 %v1392
        %v1466 = vpop.f32.mrf.mxu0
        %v1467 = vadd.f32 0.0, %v1466
        %v1468 = vpop.f32.mrf.mxu0
        %1469 = vdwg.mxu0
        %1470 = vmatpush.bf16.msra.mxu0 0
        %1471 = vmatpush.bf16.msra.mxu0 0
        %1472 = vmatpush.bf16.msra.mxu0 0
        %1473 = vmatpush.bf16.msra.mxu0 0
        %1474 = vmatpush.bf16.msra.mxu0 0
        %1475 = vmatpush.bf16.msra.mxu0 0
        %1476 = vmatpush.bf16.msra.mxu0 0
        %1477 = vmatpush.bf16.msra.mxu0 %v1407
        %1478 = vmatmul.bf16.gmra.mxu0 %v1392
        %v1479 = vpop.f32.mrf.mxu0
        %v1480 = vadd.f32 0.0, %v1479
        %v1481 = vpop.f32.mrf.mxu0
        %1482 = vdwg.mxu0
        %1483 = vmatpush.bf16.msra.mxu0 0
        %1484 = vmatpush.bf16.msra.mxu0 0
        %1485 = vmatpush.bf16.msra.mxu0 0
        %1486 = vmatpush.bf16.msra.mxu0 0
        %1487 = vmatpush.bf16.msra.mxu0 0
        %1488 = vmatpush.bf16.msra.mxu0 0
        %1489 = vmatpush.bf16.msra.mxu0 0
        %1490 = vmatpush.bf16.msra.mxu0 %v1410
        %1491 = vmatmul.bf16.gmra.mxu0 %v1392
        %v1492 = vpop.f32.mrf.mxu0
        %v1493 = vadd.f32 0.0, %v1492
        %v1494 = vpop.f32.mrf.mxu0
        %1495 = vdwg.mxu0
        %1496 = vmatpush.bf16.msra.mxu0 0
        %1497 = vmatpush.bf16.msra.mxu0 0
        %1498 = vmatpush.bf16.msra.mxu0 0
        %1499 = vmatpush.bf16.msra.mxu0 0
        %1500 = vmatpush.bf16.msra.mxu0 0
        %1501 = vmatpush.bf16.msra.mxu0 0
        %1502 = vmatpush.bf16.msra.mxu0 0
        %1503 = vmatpush.bf16.msra.mxu0 %v1413
        %1504 = vmatmul.bf16.gmra.mxu0 %v1392
        %v1505 = vpop.f32.mrf.mxu0
        %v1506 = vadd.f32 0.0, %v1505
        %v1507 = vpop.f32.mrf.mxu0
        %1508 = vdwg.mxu0
        %1509 = vmatpush.bf16.msra.mxu0 0
        %1510 = vmatpush.bf16.msra.mxu0 0
        %1511 = vmatpush.bf16.msra.mxu0 0
        %1512 = vmatpush.bf16.msra.mxu0 0
        %1513 = vmatpush.bf16.msra.mxu0 0
        %1514 = vmatpush.bf16.msra.mxu0 0
        %1515 = vmatpush.bf16.msra.mxu0 0
        %1516 = vmatpush.bf16.msra.mxu0 %v1416
        %1517 = vmatmul.bf16.gmra.mxu0 %v1392
        %v1518 = vpop.f32.mrf.mxu0
        %v1519 = vadd.f32 0.0, %v1518
        %v1520 = vpop.f32.mrf.mxu0
        %1521 = vdwg.mxu0
        %1522 = vst [vmem:[#allocation1] ss:$4 sm:$0xff] %v1332
        %s1523 = scalar_lea.vmem [#allocation1], 32
        %1524 = vst [vmem:[%s1523] ss:$4 sm:$0xff] %v1333
        %v1525 = vld.sshfl [vmem:[#allocation1] sm:$0xff pattern:$0x73625140]
        %v1527 = vld.sshfl [vmem:[#allocation1 + $0x8] sm:$0xff pattern:$0x73625140]
        %v1529 = vld.sshfl [vmem:[#allocation1 + $0x10] sm:$0xff pattern:$0x73625140]
        %v1531 = vld.sshfl [vmem:[#allocation1 + $0x18] sm:$0xff pattern:$0x73625140]
        %v1533 = vld.sshfl [vmem:[#allocation1 + $0x20] sm:$0xff pattern:$0x73625140]
        %v1535 = vld.sshfl [vmem:[#allocation1 + $0x28] sm:$0xff pattern:$0x73625140]
        %v1537 = vld.sshfl [vmem:[#allocation1 + $0x30] sm:$0xff pattern:$0x73625140]
        %v1539 = vld.sshfl [vmem:[#allocation1 + $0x38] sm:$0xff pattern:$0x73625140]
        %1541 = vst [vmem:[#allocation1] ss:$4 sm:$0xff] %v1334
        %v1542 = vld.sshfl [vmem:[#allocation1] sm:$0xff pattern:$0x73625140]
        %1544 = vrot.lane.b32.xlu0 %v1525, 126
        %v1545 = vpop.permute.xlu0 %1544
        %1546 = vrot.lane.b32.xlu0 %v1527, 126
        %v1547 = vpop.permute.xlu0 %1546
        %1548 = vrot.lane.b32.xlu0 %v1529, 126
        %v1549 = vpop.permute.xlu0 %1548
        %1550 = vrot.lane.b32.xlu0 %v1531, 126
        %v1551 = vpop.permute.xlu0 %1550
        %1552 = vrot.lane.b32.xlu0 %v1533, 126
        %v1553 = vpop.permute.xlu0 %1552
        %1554 = vrot.lane.b32.xlu0 %v1535, 126
        %v1555 = vpop.permute.xlu0 %1554
        %1556 = vrot.lane.b32.xlu0 %v1537, 126
        %v1557 = vpop.permute.xlu0 %1556
        %1558 = vrot.lane.b32.xlu0 %v1539, 126
        %v1559 = vpop.permute.xlu0 %1558
        %1560 = vrot.lane.b32.xlu0 %v1542, 126
        %v1561 = vpop.permute.xlu0 %1560
        %vm1562 = vcmask 1031168
        %v1563 = vsel %vm1562, %v1545, %v1547
        %v1564 = vsel %vm1562, %v1547, %v1549
        %v1565 = vsel %vm1562, %v1549, %v1551
        %v1566 = vsel %vm1562, %v1551, %v1553
        %v1567 = vsel %vm1562, %v1553, %v1555
        %v1568 = vsel %vm1562, %v1555, %v1557
        %v1569 = vsel %vm1562, %v1557, %v1559
        %v1570 = vsel %vm1562, %v1559, %v1561
        %v1572 = vsel %vm303, %v1336, 0
        %v1575 = vsel %vm307, %v1563, 0
        %v1578 = vsel %vm307, %v1564, 0
        %v1581 = vsel %vm307, %v1565, 0
        %v1584 = vsel %vm307, %v1566, 0
        %v1587 = vsel %vm307, %v1567, 0
        %v1590 = vsel %vm307, %v1568, 0
        %v1593 = vsel %vm307, %v1569, 0
        %v1596 = vsel %vm307, %v1570, 0
        %1598 = vmatpush.bf16.msra.mxu0 0
        %1599 = vmatpush.bf16.msra.mxu0 0
        %1600 = vmatpush.bf16.msra.mxu0 0
        %1601 = vmatpush.bf16.msra.mxu0 0
        %1602 = vmatpush.bf16.msra.mxu0 0
        %1603 = vmatpush.bf16.msra.mxu0 0
        %1604 = vmatpush.bf16.msra.mxu0 0
        %1605 = vmatpush.bf16.msra.mxu0 %v1575
        %1606 = vmatmul.bf16.gmra.mxu0 %v1572
        %v1607 = vpop.f32.mrf.mxu0
        %v1608 = vadd.f32 %v1428, %v1607
        %v1609 = vpop.f32.mrf.mxu0
        %1610 = vdwg.mxu0
        %1611 = vmatpush.bf16.msra.mxu0 0
        %1612 = vmatpush.bf16.msra.mxu0 0
        %1613 = vmatpush.bf16.msra.mxu0 0
        %1614 = vmatpush.bf16.msra.mxu0 0
        %1615 = vmatpush.bf16.msra.mxu0 0
        %1616 = vmatpush.bf16.msra.mxu0 0
        %1617 = vmatpush.bf16.msra.mxu0 0
        %1618 = vmatpush.bf16.msra.mxu0 %v1578
        %1619 = vmatmul.bf16.gmra.mxu0 %v1572
        %v1620 = vpop.f32.mrf.mxu0
        %v1621 = vadd.f32 %v1441, %v1620
        %v1622 = vpop.f32.mrf.mxu0
        %1623 = vdwg.mxu0
        %1624 = vmatpush.bf16.msra.mxu0 0
        %1625 = vmatpush.bf16.msra.mxu0 0
        %1626 = vmatpush.bf16.msra.mxu0 0
        %1627 = vmatpush.bf16.msra.mxu0 0
        %1628 = vmatpush.bf16.msra.mxu0 0
        %1629 = vmatpush.bf16.msra.mxu0 0
        %1630 = vmatpush.bf16.msra.mxu0 0
        %1631 = vmatpush.bf16.msra.mxu0 %v1581
        %1632 = vmatmul.bf16.gmra.mxu0 %v1572
        %v1633 = vpop.f32.mrf.mxu0
        %v1634 = vadd.f32 %v1454, %v1633
        %v1635 = vpop.f32.mrf.mxu0
        %1636 = vdwg.mxu0
        %1637 = vmatpush.bf16.msra.mxu0 0
        %1638 = vmatpush.bf16.msra.mxu0 0
        %1639 = vmatpush.bf16.msra.mxu0 0
        %1640 = vmatpush.bf16.msra.mxu0 0
        %1641 = vmatpush.bf16.msra.mxu0 0
        %1642 = vmatpush.bf16.msra.mxu0 0
        %1643 = vmatpush.bf16.msra.mxu0 0
        %1644 = vmatpush.bf16.msra.mxu0 %v1584
        %1645 = vmatmul.bf16.gmra.mxu0 %v1572
        %v1646 = vpop.f32.mrf.mxu0
        %v1647 = vadd.f32 %v1467, %v1646
        %v1648 = vpop.f32.mrf.mxu0
        %1649 = vdwg.mxu0
        %1650 = vmatpush.bf16.msra.mxu0 0
        %1651 = vmatpush.bf16.msra.mxu0 0
        %1652 = vmatpush.bf16.msra.mxu0 0
        %1653 = vmatpush.bf16.msra.mxu0 0
        %1654 = vmatpush.bf16.msra.mxu0 0
        %1655 = vmatpush.bf16.msra.mxu0 0
        %1656 = vmatpush.bf16.msra.mxu0 0
        %1657 = vmatpush.bf16.msra.mxu0 %v1587
        %1658 = vmatmul.bf16.gmra.mxu0 %v1572
        %v1659 = vpop.f32.mrf.mxu0
        %v1660 = vadd.f32 %v1480, %v1659
        %v1661 = vpop.f32.mrf.mxu0
        %1662 = vdwg.mxu0
        %1663 = vmatpush.bf16.msra.mxu0 0
        %1664 = vmatpush.bf16.msra.mxu0 0
        %1665 = vmatpush.bf16.msra.mxu0 0
        %1666 = vmatpush.bf16.msra.mxu0 0
        %1667 = vmatpush.bf16.msra.mxu0 0
        %1668 = vmatpush.bf16.msra.mxu0 0
        %1669 = vmatpush.bf16.msra.mxu0 0
        %1670 = vmatpush.bf16.msra.mxu0 %v1590
        %1671 = vmatmul.bf16.gmra.mxu0 %v1572
        %v1672 = vpop.f32.mrf.mxu0
        %v1673 = vadd.f32 %v1493, %v1672
        %v1674 = vpop.f32.mrf.mxu0
        %1675 = vdwg.mxu0
        %1676 = vmatpush.bf16.msra.mxu0 0
        %1677 = vmatpush.bf16.msra.mxu0 0
        %1678 = vmatpush.bf16.msra.mxu0 0
        %1679 = vmatpush.bf16.msra.mxu0 0
        %1680 = vmatpush.bf16.msra.mxu0 0
        %1681 = vmatpush.bf16.msra.mxu0 0
        %1682 = vmatpush.bf16.msra.mxu0 0
        %1683 = vmatpush.bf16.msra.mxu0 %v1593
        %1684 = vmatmul.bf16.gmra.mxu0 %v1572
        %v1685 = vpop.f32.mrf.mxu0
        %v1686 = vadd.f32 %v1506, %v1685
        %v1687 = vpop.f32.mrf.mxu0
        %1688 = vdwg.mxu0
        %1689 = vmatpush.bf16.msra.mxu0 0
        %1690 = vmatpush.bf16.msra.mxu0 0
        %1691 = vmatpush.bf16.msra.mxu0 0
        %1692 = vmatpush.bf16.msra.mxu0 0
        %1693 = vmatpush.bf16.msra.mxu0 0
        %1694 = vmatpush.bf16.msra.mxu0 0
        %1695 = vmatpush.bf16.msra.mxu0 0
        %1696 = vmatpush.bf16.msra.mxu0 %v1596
        %1697 = vmatmul.bf16.gmra.mxu0 %v1572
        %v1698 = vpop.f32.mrf.mxu0
        %v1699 = vadd.f32 %v1519, %v1698
        %v1700 = vpop.f32.mrf.mxu0
        %1701 = vdwg.mxu0
        %v1702 = vld [vmem:[%s235] sm:$0xff]
        %v1703 = vld [vmem:[%s235 + $0x8] sm:$0xff]
        %v1704 = vld [vmem:[%s235 + $0x10] sm:$0x3]
        %s1705 = scalar_lea.vmem %s239, 32
        %v1706 = vld [vmem:[%s1705] sm:$0xf]
        %1708 = vst [vmem:[#allocation1] ss:$4 sm:$0xff] %v1702
        %s1710 = scalar_lea.vmem [#allocation1], 32
        %1711 = vst [vmem:[%s1710] ss:$4 sm:$0xff] %v1703
        %v1712 = vld.sshfl [vmem:[#allocation1] sm:$0xff pattern:$0x73625140]
        %v1714 = vld.sshfl [vmem:[#allocation1 + $0x8] sm:$0xff pattern:$0x73625140]
        %v1716 = vld.sshfl [vmem:[#allocation1 + $0x10] sm:$0xff pattern:$0x73625140]
        %v1718 = vld.sshfl [vmem:[#allocation1 + $0x18] sm:$0xff pattern:$0x73625140]
        %v1720 = vld.sshfl [vmem:[#allocation1 + $0x20] sm:$0xff pattern:$0x73625140]
        %v1722 = vld.sshfl [vmem:[#allocation1 + $0x28] sm:$0xff pattern:$0x73625140]
        %v1724 = vld.sshfl [vmem:[#allocation1 + $0x30] sm:$0xff pattern:$0x73625140]
        %v1726 = vld.sshfl [vmem:[#allocation1 + $0x38] sm:$0xff pattern:$0x73625140]
        %1729 = vst [vmem:[#allocation1] ss:$4 sm:$0xff] %v1704
        %v1730 = vld.sshfl [vmem:[#allocation1] sm:$0xff pattern:$0x73625140]
        %1732 = vrot.lane.b32.xlu0 %v1712, 62
        %v1733 = vpop.permute.xlu0 %1732
        %1734 = vrot.lane.b32.xlu0 %v1714, 62
        %v1735 = vpop.permute.xlu0 %1734
        %1736 = vrot.lane.b32.xlu0 %v1716, 62
        %v1737 = vpop.permute.xlu0 %1736
        %1738 = vrot.lane.b32.xlu0 %v1718, 62
        %v1739 = vpop.permute.xlu0 %1738
        %1740 = vrot.lane.b32.xlu0 %v1720, 62
        %v1741 = vpop.permute.xlu0 %1740
        %1742 = vrot.lane.b32.xlu0 %v1722, 62
        %v1743 = vpop.permute.xlu0 %1742
        %1744 = vrot.lane.b32.xlu0 %v1724, 62
        %v1745 = vpop.permute.xlu0 %1744
        %1746 = vrot.lane.b32.xlu0 %v1726, 62
        %v1747 = vpop.permute.xlu0 %1746
        %1748 = vrot.lane.b32.xlu0 %v1730, 62
        %v1749 = vpop.permute.xlu0 %1748
        %vm1750 = vcmask 506880
        %v1751 = vsel %vm1750, %v1733, %v1735
        %v1752 = vsel %vm1750, %v1735, %v1737
        %v1753 = vsel %vm1750, %v1737, %v1739
        %v1754 = vsel %vm1750, %v1739, %v1741
        %v1755 = vsel %vm1750, %v1741, %v1743
        %v1756 = vsel %vm1750, %v1743, %v1745
        %v1757 = vsel %vm1750, %v1745, %v1747
        %v1758 = vsel %vm1750, %v1747, %v1749
        %v1760 = vsel %vm303, %v1706, 0
        %v1763 = vsel %vm307, %v1751, 0
        %v1766 = vsel %vm307, %v1752, 0
        %v1769 = vsel %vm307, %v1753, 0
        %v1772 = vsel %vm307, %v1754, 0
        %v1775 = vsel %vm307, %v1755, 0
        %v1778 = vsel %vm307, %v1756, 0
        %v1781 = vsel %vm307, %v1757, 0
        %v1784 = vsel %vm307, %v1758, 0
        %1786 = vmatpush.bf16.msra.mxu0 0
        %1787 = vmatpush.bf16.msra.mxu0 0
        %1788 = vmatpush.bf16.msra.mxu0 0
        %1789 = vmatpush.bf16.msra.mxu0 0
        %1790 = vmatpush.bf16.msra.mxu0 0
        %1791 = vmatpush.bf16.msra.mxu0 0
        %1792 = vmatpush.bf16.msra.mxu0 0
        %1793 = vmatpush.bf16.msra.mxu0 %v1763
        %1794 = vmatmul.bf16.gmra.mxu0 %v1760
        %v1795 = vpop.f32.mrf.mxu0
        %v1796 = vadd.f32 0.0, %v1795
        %v1797 = vpop.f32.mrf.mxu0
        %1798 = vdwg.mxu0
        %1799 = vmatpush.bf16.msra.mxu0 0
        %1800 = vmatpush.bf16.msra.mxu0 0
        %1801 = vmatpush.bf16.msra.mxu0 0
        %1802 = vmatpush.bf16.msra.mxu0 0
        %1803 = vmatpush.bf16.msra.mxu0 0
        %1804 = vmatpush.bf16.msra.mxu0 0
        %1805 = vmatpush.bf16.msra.mxu0 0
        %1806 = vmatpush.bf16.msra.mxu0 %v1766
        %1807 = vmatmul.bf16.gmra.mxu0 %v1760
        %v1808 = vpop.f32.mrf.mxu0
        %v1809 = vadd.f32 0.0, %v1808
        %v1810 = vpop.f32.mrf.mxu0
        %1811 = vdwg.mxu0
        %1812 = vmatpush.bf16.msra.mxu0 0
        %1813 = vmatpush.bf16.msra.mxu0 0
        %1814 = vmatpush.bf16.msra.mxu0 0
        %1815 = vmatpush.bf16.msra.mxu0 0
        %1816 = vmatpush.bf16.msra.mxu0 0
        %1817 = vmatpush.bf16.msra.mxu0 0
        %1818 = vmatpush.bf16.msra.mxu0 0
        %1819 = vmatpush.bf16.msra.mxu0 %v1769
        %1820 = vmatmul.bf16.gmra.mxu0 %v1760
        %v1821 = vpop.f32.mrf.mxu0
        %v1822 = vadd.f32 0.0, %v1821
        %v1823 = vpop.f32.mrf.mxu0
        %1824 = vdwg.mxu0
        %1825 = vmatpush.bf16.msra.mxu0 0
        %1826 = vmatpush.bf16.msra.mxu0 0
        %1827 = vmatpush.bf16.msra.mxu0 0
        %1828 = vmatpush.bf16.msra.mxu0 0
        %1829 = vmatpush.bf16.msra.mxu0 0
        %1830 = vmatpush.bf16.msra.mxu0 0
        %1831 = vmatpush.bf16.msra.mxu0 0
        %1832 = vmatpush.bf16.msra.mxu0 %v1772
        %1833 = vmatmul.bf16.gmra.mxu0 %v1760
        %v1834 = vpop.f32.mrf.mxu0
        %v1835 = vadd.f32 0.0, %v1834
        %v1836 = vpop.f32.mrf.mxu0
        %1837 = vdwg.mxu0
        %1838 = vmatpush.bf16.msra.mxu0 0
        %1839 = vmatpush.bf16.msra.mxu0 0
        %1840 = vmatpush.bf16.msra.mxu0 0
        %1841 = vmatpush.bf16.msra.mxu0 0
        %1842 = vmatpush.bf16.msra.mxu0 0
        %1843 = vmatpush.bf16.msra.mxu0 0
        %1844 = vmatpush.bf16.msra.mxu0 0
        %1845 = vmatpush.bf16.msra.mxu0 %v1775
        %1846 = vmatmul.bf16.gmra.mxu0 %v1760
        %v1847 = vpop.f32.mrf.mxu0
        %v1848 = vadd.f32 0.0, %v1847
        %v1849 = vpop.f32.mrf.mxu0
        %1850 = vdwg.mxu0
        %1851 = vmatpush.bf16.msra.mxu0 0
        %1852 = vmatpush.bf16.msra.mxu0 0
        %1853 = vmatpush.bf16.msra.mxu0 0
        %1854 = vmatpush.bf16.msra.mxu0 0
        %1855 = vmatpush.bf16.msra.mxu0 0
        %1856 = vmatpush.bf16.msra.mxu0 0
        %1857 = vmatpush.bf16.msra.mxu0 0
        %1858 = vmatpush.bf16.msra.mxu0 %v1778
        %1859 = vmatmul.bf16.gmra.mxu0 %v1760
        %v1860 = vpop.f32.mrf.mxu0
        %v1861 = vadd.f32 0.0, %v1860
        %v1862 = vpop.f32.mrf.mxu0
        %1863 = vdwg.mxu0
        %1864 = vmatpush.bf16.msra.mxu0 0
        %1865 = vmatpush.bf16.msra.mxu0 0
        %1866 = vmatpush.bf16.msra.mxu0 0
        %1867 = vmatpush.bf16.msra.mxu0 0
        %1868 = vmatpush.bf16.msra.mxu0 0
        %1869 = vmatpush.bf16.msra.mxu0 0
        %1870 = vmatpush.bf16.msra.mxu0 0
        %1871 = vmatpush.bf16.msra.mxu0 %v1781
        %1872 = vmatmul.bf16.gmra.mxu0 %v1760
        %v1873 = vpop.f32.mrf.mxu0
        %v1874 = vadd.f32 0.0, %v1873
        %v1875 = vpop.f32.mrf.mxu0
        %1876 = vdwg.mxu0
        %1877 = vmatpush.bf16.msra.mxu0 0
        %1878 = vmatpush.bf16.msra.mxu0 0
        %1879 = vmatpush.bf16.msra.mxu0 0
        %1880 = vmatpush.bf16.msra.mxu0 0
        %1881 = vmatpush.bf16.msra.mxu0 0
        %1882 = vmatpush.bf16.msra.mxu0 0
        %1883 = vmatpush.bf16.msra.mxu0 0
        %1884 = vmatpush.bf16.msra.mxu0 %v1784
        %1885 = vmatmul.bf16.gmra.mxu0 %v1760
        %v1886 = vpop.f32.mrf.mxu0
        %v1887 = vadd.f32 0.0, %v1886
        %v1888 = vpop.f32.mrf.mxu0
        %1889 = vdwg.mxu0
        %v1890 = vadd.f32 %v1608, %v1796
        %v1891 = vadd.f32 %v1621, %v1809
        %v1892 = vadd.f32 %v1634, %v1822
        %v1893 = vadd.f32 %v1647, %v1835
        %v1894 = vadd.f32 %v1660, %v1848
        %v1895 = vadd.f32 %v1673, %v1861
        %v1896 = vadd.f32 %v1686, %v1874
        %v1897 = vadd.f32 %v1699, %v1887
        %v1898 = vld [vmem:[%s3] ss:$2 sm:$0xff]
        %v1900 = vperm.slane %v1898, 0
        %v1901 = vperm.slane %v1898, 1
        %v1902 = vperm.slane %v1898, 2
        %v1903 = vperm.slane %v1898, 3
        %v1904 = vperm.slane %v1898, 4
        %v1905 = vperm.slane %v1898, 5
        %v1906 = vperm.slane %v1898, 6
        %v1907 = vperm.slane %v1898, 7
        %v1916 = vmul.f32 %v758, %v1900
        %v1917 = vmul.f32 %v759, %v1901
        %v1918 = vmul.f32 %v760, %v1902
        %v1919 = vmul.f32 %v761, %v1903
        %v1920 = vmul.f32 %v762, %v1904
        %v1921 = vmul.f32 %v763, %v1905
        %v1922 = vmul.f32 %v764, %v1906
        %v1923 = vmul.f32 %v765, %v1907
        %v1924 = vadd.f32 %v1324, %v1916
        %v1925 = vadd.f32 %v1325, %v1917
        %v1926 = vadd.f32 %v1326, %v1918
        %v1927 = vadd.f32 %v1327, %v1919
        %v1928 = vadd.f32 %v1328, %v1920
        %v1929 = vadd.f32 %v1329, %v1921
        %v1930 = vadd.f32 %v1330, %v1922
        %v1931 = vadd.f32 %v1331, %v1923
        %s1932 = scalar_lea.vmem %s3, 1
        %v1933 = vld [vmem:[%s1932] ss:$2 sm:$0xff]
        %v1935 = vperm.slane %v1933, 0
        %v1936 = vperm.slane %v1933, 1
        %v1937 = vperm.slane %v1933, 2
        %v1938 = vperm.slane %v1933, 3
        %v1939 = vperm.slane %v1933, 4
        %v1940 = vperm.slane %v1933, 5
        %v1941 = vperm.slane %v1933, 6
        %v1942 = vperm.slane %v1933, 7
        %v1951 = vmul.f32 %v1890, %v1935
        %v1952 = vmul.f32 %v1891, %v1936
        %v1953 = vmul.f32 %v1892, %v1937
        %v1954 = vmul.f32 %v1893, %v1938
        %v1955 = vmul.f32 %v1894, %v1939
        %v1956 = vmul.f32 %v1895, %v1940
        %v1957 = vmul.f32 %v1896, %v1941
        %v1958 = vmul.f32 %v1897, %v1942
        %v1959 = vadd.f32 %v1924, %v1951
        %v1960 = vadd.f32 %v1925, %v1952
        %v1961 = vadd.f32 %v1926, %v1953
        %v1962 = vadd.f32 %v1927, %v1954
        %v1963 = vadd.f32 %v1928, %v1955
        %v1964 = vadd.f32 %v1929, %v1956
        %v1965 = vadd.f32 %v1930, %v1957
        %v1966 = vadd.f32 %v1931, %v1958
        %v1967 = vld [vmem:[%s243] sm:$0xff]
        %1969 = vset.pattern.permute.xlu0 0
        %1970 = vperm.xlu0 %1969, %v1967
        %v1971 = vpop.permute.xlu0 %1970
        %v1973 = vadd.f32 %v1959, %v1971
        %v1974 = vadd.f32 %v1960, %v1971
        %v1975 = vadd.f32 %v1961, %v1971
        %v1976 = vadd.f32 %v1962, %v1971
        %v1977 = vadd.f32 %v1963, %v1971
        %v1978 = vadd.f32 %v1964, %v1971
        %v1979 = vadd.f32 %v1965, %v1971
        %v1980 = vadd.f32 %v1966, %v1971
        %v1981 = vmul.f32 %v1973, 0.2
        %v1982 = vmul.f32 %v1974, 0.2
        %v1983 = vmul.f32 %v1975, 0.2
        %v1984 = vmul.f32 %v1976, 0.2
        %v1985 = vmul.f32 %v1977, 0.2
        %v1986 = vmul.f32 %v1978, 0.2
        %v1987 = vmul.f32 %v1979, 0.2
        %v1988 = vmul.f32 %v1980, 0.2
        %v1989 = vmax.f32 %v1973, %v1981
        %v1990 = vmax.f32 %v1974, %v1982
        %v1991 = vmax.f32 %v1975, %v1983
        %v1992 = vmax.f32 %v1976, %v1984
        %v1993 = vmax.f32 %v1977, %v1985
        %v1994 = vmax.f32 %v1978, %v1986
        %v1995 = vmax.f32 %v1979, %v1987
        %v1996 = vmax.f32 %v1980, %v1988
        %v1997 = vpack.c.bf16 %v1990, %v1989
        %v1998 = vpack.c.bf16 %v1992, %v1991
        %v1999 = vpack.c.bf16 %v1994, %v1993
        %v2000 = vpack.c.bf16 %v1996, %v1995
        %2001 = vst [vmem:[%s230] sm:$0xff] %v1997
        %2002 = vst [vmem:[%s230 + $0x8] sm:$0xff] %v1998
        %2003 = vst [vmem:[%s230 + $0x10] sm:$0xff] %v1999
        %2004 = vst [vmem:[%s230 + $0x18] sm:$0xff] %v2000
        %s2005 = sand.u32 %s139, 1
        %s2006 = scalar_lea.sflag [#allocation3], %s2005
        %s2007 = sand.u32 %s139, 1
        %s2008 = smul.addr %s2007, 32
        %s2009 = scalar_lea.vmem [#allocation2], %s2008
        // Predicated region
        $region37: #{tpu_custom_call.1} parent=35 // pred_check
          %p2010 = pneg %p149
        $region38: #{tpu_custom_call.1} parent=35 // pred_check_branch
          %2012 = sbr.rel (%p2010) target = $region40
        $region39: #{tpu_custom_call.1} parent=35 // pred_region
          %2014 = vsyncadd %s2006, 0
          %s2015 = smul.addr %s23, 8
          %s2016 = smul.addr %s22, 8
          %s2017 = sadd.s32 %s2015, %s2016
          %s2018 = smul.addr %s2017, 4
          %s2019 = scalar_lea.hbm %s4, %s2018
          %s2021 = sshll.u32 %s2009, 4
          %s2022 = int_to_ptr.vmem [resolvable:$true] %s2021
          %s2023 = sshll.u32 %s2019, 4
          %s2024 = int_to_ptr.hbm [resolvable:$true] %s2023
          %2026 = dma.vmem_to_hbm [thread:$0]  %s2022, 512, %s2024, %s2006
        $region40: #{tpu_custom_call.1} parent=35 // pred_fallthru
          _
      $region36: #{tpu_custom_call.1} parent=5 // pred_fallthru
        _
      %p2027 = scmp.le.s32.totalorder 2, %s13
      // Predicated region
      $region41: #{tpu_custom_call.1} parent=5 // pred_check
        %p2028 = pneg %p2027
      $region42: #{tpu_custom_call.1} parent=5 // pred_check_branch
        %2030 = sbr.rel (%p2028) target = $region44
      $region43: #{tpu_custom_call.1} parent=5 // pred_region
        %s2031 = ssub.s32 %s13, 2
        // Predicated region
        $region45: #{tpu_custom_call.1} parent=43 // pred_check
          %p2032 = pneg %p155
        $region46: #{tpu_custom_call.1} parent=43 // pred_check_branch
          %2034 = sbr.rel (%p2032) target = $region48
        $region47: #{tpu_custom_call.1} parent=43 // pred_region
          %s2035 = sand.u32 %s140, 1
          %s2036 = scalar_lea.sflag [#allocation3], %s2035
          %s2037 = sand.u32 %s140, 1
          %s2038 = smul.addr %s2037, 32
          %s2039 = scalar_lea.vmem [#allocation2], %s2038
          %2041 = dma.done %s2036, 512
        $region48: #{tpu_custom_call.1} parent=43 // pred_fallthru
          _
      $region44: #{tpu_custom_call.1} parent=5 // pred_fallthru
        _
    $region6: #{tpu_custom_call.1} parent=1 // loop_footer
      %s17 = sadd.s32 1, %s13
    $region7: #{tpu_custom_call.1} parent=1 // loop_footer_branch
      %12 = sbr.rel target = $region3
    $region8: #{tpu_custom_call.1} parent=1 // loop_exit
      _
    %2042 = vsyncpa [#allocation3], 1
    %s2043 = scalar_lea.sflag [#allocation3], 1
    %2044 = vsyncpa %s2043, 1

</llo_original>
